<compile_context>
chip_gen: v7x
topology: tpu7x:2x2x1
jax: 0.10.0
libtpu: 0.0.40
codegen_flags: <defaults>
</compile_context>

<pallas_src>
import functools
import math

import jax
import jax.numpy as jnp
from jax.experimental import pallas as pl
from jax.experimental.pallas import tpu as pltpu

EMB = 80
NUM_HEADS = 4
HEAD_DIM = EMB // NUM_HEADS  # 20
LANE = 128


def _mha_kernel(x_ref, wq_ref, wk_ref, bq_ref, wvp_ref, bp_ref, out_ref, acc_ref,
                *, num_heads, seq_len, batch_block, mxu_dtype):
    """Fused MHA for `batch_block` batch elements (rows flattened to batch_block*seq_len)."""
    x = x_ref[...].astype(mxu_dtype)                 # (Bb*N, E)
    acc_ref[...] = jnp.zeros_like(acc_ref)

    # Static (unrolled) loops: num_heads * batch_block independent chains -> ILP for LLO.
    for h in range(num_heads):
        # Q / K projections (K bias dropped: cancels in softmax).
        qh = jnp.dot(x, wq_ref[h].astype(mxu_dtype),
                     preferred_element_type=jnp.float32) + bq_ref[h]      # (Bb*N, dh)
        kh = jnp.dot(x, wk_ref[h].astype(mxu_dtype),
                     preferred_element_type=jnp.float32)                  # (Bb*N, dh)
        # V projection fused with the output projection (+ 1/sqrt(emb) scale), lane-dense.
        vp = jnp.dot(x, wvp_ref[h].astype(mxu_dtype),
                     preferred_element_type=jnp.float32)                  # (Bb*N, 128)

        for b in range(batch_block):
            rows = slice(b * seq_len, (b + 1) * seq_len)
            qb = qh[rows].astype(mxu_dtype)
            kb = kh[rows].astype(mxu_dtype)

            # energy[q, k] = sum_d qb[q, d] * kb[k, d]   (no pre-softmax scaling, per spec)
            energy = jax.lax.dot_general(
                qb, kb, (((1,), (1,)), ((), ())),
                preferred_element_type=jnp.float32)                       # (N, N)

            # Numerically stable softmax over keys; normalization on the EUP.
            energy = energy - jnp.max(energy, axis=-1, keepdims=True)
            p = jnp.exp(energy)
            att = p * pl.reciprocal(jnp.sum(p, axis=-1, keepdims=True), approx=True)
            # TODO(synk): att_drop (nn.Dropout(0.2)) treated as identity (inference mode).

            acc_ref[rows, :] = acc_ref[rows, :] + jnp.dot(
                att.astype(mxu_dtype), vp[rows].astype(mxu_dtype),
                preferred_element_type=jnp.float32)

    out_ref[...] = (acc_ref[...] + bp_ref[...]).astype(out_ref.dtype)


def multi_head_attention_forward(x, params, *, num_heads=NUM_HEADS, batch_block=None,
                                 mxu_dtype=jnp.float32):
    """x: (B, N, emb). params: (w_qkv(3E,E), b_qkv(3E,), w_proj(E,E), b_proj(E,))."""
    w_qkv, b_qkv, w_proj, b_proj = params
    B, N, E = x.shape
    dh = E // num_heads
    ep = pl.cdiv(E, LANE) * LANE          # lane-dense padded output width (80 -> 128)

    if batch_block is None:
        # Two grid steps by default so both v7x TensorCores get work; on single-TC chips
        # (v5e/v6e) pass batch_block=B to collapse the grid to one step.
        batch_block = B // 2 if (B % 2 == 0 and B > 1) else 1
    assert B % batch_block == 0, "batch_block must divide B"
    assert N % 8 == 0, "seq_len must be a multiple of 8 (sublane alignment)"
    # TODO(synk): for N >~ 256 add a query-tile grid axis + online softmax instead of the
    # full (N, N) energy per head (VMEM/vreg is O(N^2); v7x's 64 MiB VMEM bites first).

    f32 = jnp.float32
    # einops 'b n (h d qkv) -> (qkv) b h n d': out-feature index f == (h*dh + d)*3 + qkv.
    w3 = w_qkv.astype(f32).reshape(num_heads, dh, 3, E)    # (h, d, qkv, in)
    b3 = b_qkv.astype(f32).reshape(num_heads, dh, 3)       # (h, d, qkv)
    wq = jnp.transpose(w3[:, :, 0, :], (0, 2, 1))          # (h, E, dh)
    wk = jnp.transpose(w3[:, :, 1, :], (0, 2, 1))          # (h, E, dh)
    wv = jnp.transpose(w3[:, :, 2, :], (0, 2, 1))          # (h, E, dh)
    bq = b3[:, :, 0][:, None, :]                           # (h, 1, dh)
    bv = b3[:, :, 2]                                       # (h, dh)
    # (bk dropped: constant along the softmax axis -> cancels exactly.)

    # Output projection split per head: the concat dim is (h d), h-major.
    wp = jnp.transpose(w_proj.astype(f32), (1, 0)).reshape(num_heads, dh, E)   # (h, dh, E)

    inv_scale = 1.0 / math.sqrt(E)
    # Fold V-proj, output proj and the post-softmax 1/sqrt(E) scale into one weight, and
    # fold the V bias (attention rows sum to 1/sqrt(E)) plus the proj bias into one bias.
    wvp = jnp.einsum('hed,hdf->hef', wv, wp) * inv_scale                        # (h, E, E)
    bp = b_proj.astype(f32) + jnp.einsum('hd,hdf->f', bv, wp) * inv_scale       # (E,)

    # Lane-dense padding of the fused projection output (80 -> 128 lanes).
    wvp_p = jnp.zeros((num_heads, E, ep), f32).at[:, :, :E].set(wvp)
    bp_p = jnp.zeros((1, ep), f32).at[:, :E].set(bp)

    x2 = x.reshape(B * N, E)              # flatten batch; no dtype upcast in the wrapper.
    rows = batch_block * N
    grid = (B // batch_block,)

    kernel = functools.partial(
        _mha_kernel, num_heads=num_heads, seq_len=N, batch_block=batch_block,
        mxu_dtype=mxu_dtype)

    const3 = lambda b: (0, 0, 0)

    out = pl.pallas_call(
        kernel,
        out_shape=jax.ShapeDtypeStruct((B * N, ep), jnp.float32),
        grid_spec=pltpu.PrefetchScalarGridSpec(
            num_scalar_prefetch=0,
            grid=grid,
            in_specs=[
                pl.BlockSpec((rows, E), lambda b: (b, 0)),     # x (batch-blocked)
                pl.BlockSpec((num_heads, E, dh), const3),      # wq
                pl.BlockSpec((num_heads, E, dh), const3),      # wk
                pl.BlockSpec((num_heads, 1, dh), const3),      # bq
                pl.BlockSpec((num_heads, E, ep), const3),      # fused Wv@Wp/sqrt(E), padded
                pl.BlockSpec((1, ep), lambda b: (0, 0)),       # fused output bias, padded
            ],
            out_specs=pl.BlockSpec((rows, ep), lambda b: (b, 0)),
            scratch_shapes=[pltpu.VMEM((rows, ep), jnp.float32)],
        ),
        compiler_params=pltpu.CompilerParams(
            dimension_semantics=("parallel",)),
    )(x2, wq, wk, bq, wvp_p, bp_p)

    return out.reshape(B, N, ep)[..., :E]


def init_params(key, emb=EMB):
    """PyTorch nn.Linear-style uniform init (same shapes as the module)."""
    k = jax.random.split(key, 4)
    s = 1.0 / math.sqrt(emb)
    w_qkv = jax.random.uniform(k[0], (3 * emb, emb), jnp.float32, -s, s)
    b_qkv = jax.random.uniform(k[1], (3 * emb,), jnp.float32, -s, s)
    w_proj = jax.random.uniform(k[2], (emb, emb), jnp.float32, -s, s)
    b_proj = jax.random.uniform(k[3], (emb,), jnp.float32, -s, s)
    return (w_qkv, b_qkv, w_proj, b_proj)


def reference_forward(x, params, *, num_heads=NUM_HEADS):
    """Pure-JAX transcription of the PyTorch forward (eval mode, mask=None)."""
    w_qkv, b_qkv, w_proj, b_proj = params
    B, N, E = x.shape
    dh = E // num_heads
    with jax.default_matmul_precision("highest"):
        qkv = x @ w_qkv.T + b_qkv                               # (B, N, 3E)
        qkv = qkv.reshape(B, N, num_heads, dh, 3)               # (h d qkv) decomposition
        qkv = jnp.transpose(qkv, (4, 0, 2, 1, 3))               # (qkv, b, h, n, d)
        q, k, v = qkv[0], qkv[1], qkv[2]
        energy = jnp.einsum('bhqd,bhkd->bhqk', q, k)
        att = jax.nn.softmax(energy, axis=-1) / (E ** 0.5)
        out = jnp.einsum('bhal,bhlv->bhav', att, v)
        out = jnp.transpose(out, (0, 2, 1, 3)).reshape(B, N, E)
        return out @ w_proj.T + b_proj


if __name__ == "__main__":
    key = jax.random.PRNGKey(0)
    kx, kp = jax.random.split(key)

    B, N = 2, 16
    x = jax.random.normal(kx, (B, N, EMB), jnp.float32)
    params = init_params(kp)

    ref = reference_forward(x, params)

    # Default config: f32 MXU operands, batch split into 2 grid steps (v7x-friendly).
    out = multi_head_attention_forward(x, params)
    out = jax.block_until_ready(out)
    assert out.shape == (B, N, EMB)
    assert jnp.allclose(out, ref, atol=1e-3, rtol=1e-3), float(jnp.max(jnp.abs(out - ref)))

    # v6e/v7x-recommended config: bf16 MXU operands, whole batch in one grid step
    # (single-TC sweet spot); looser tolerance accounts for bf16 operand rounding.
    out_bf = multi_head_attention_forward(x, params, batch_block=B, mxu_dtype=jnp.bfloat16)
    out_bf = jax.block_until_ready(out_bf)
    assert out_bf.shape == (B, N, EMB)
    assert jnp.allclose(out_bf, ref, atol=1e-2, rtol=1e-2), float(jnp.max(jnp.abs(out_bf - ref)))

    print("KERNEL_OK")
</pallas_src>

<mosaic_0001>
module attributes {stable_mosaic.version = 11 : i64} {
  func.func @_mha_kernel(%arg0: i32, %arg1: memref<16x80xf32, #tpu.memory_space<vmem>>, %arg2: memref<4x80x20xf32, #tpu.memory_space<vmem>>, %arg3: memref<4x80x20xf32, #tpu.memory_space<vmem>>, %arg4: memref<4x1x20xf32, #tpu.memory_space<vmem>>, %arg5: memref<4x80x128xf32, #tpu.memory_space<vmem>>, %arg6: memref<1x128xf32, #tpu.memory_space<vmem>>, %arg7: memref<16x128xf32, #tpu.memory_space<vmem>>, %arg8: memref<16x128xf32, #tpu.memory_space<vmem>>) attributes {dimension_semantics = [#tpu.dimension_semantics<parallel>], iteration_bounds = array<i64: 2>, scalar_prefetch = 0 : i64, scratch_operands = 1 : i64, tpu.core_type = #tpu.core_type<tc>, window_params = [{transform_indices = @transform_0, window_bounds = array<i64: 16, 80>}, {pipeline_mode = #tpu.pipeline_mode<synchronous>, transform_indices = @transform_1, window_bounds = array<i64: 4, 80, 20>}, {pipeline_mode = #tpu.pipeline_mode<synchronous>, transform_indices = @transform_2, window_bounds = array<i64: 4, 80, 20>}, {pipeline_mode = #tpu.pipeline_mode<synchronous>, transform_indices = @transform_3, window_bounds = array<i64: 4, 1, 20>}, {pipeline_mode = #tpu.pipeline_mode<synchronous>, transform_indices = @transform_4, window_bounds = array<i64: 4, 80, 128>}, {pipeline_mode = #tpu.pipeline_mode<synchronous>, transform_indices = @transform_5, window_bounds = array<i64: 1, 128>}, {transform_indices = @transform_6, window_bounds = array<i64: 16, 128>}]} {
    %c0 = arith.constant 0 : index
    %c0_0 = arith.constant 0 : index
    %0 = vector.load %arg1[%c0, %c0_0] : memref<16x80xf32, #tpu.memory_space<vmem>>, vector<16x80xf32>
    %cst = arith.constant 0.000000e+00 : f32
    %1 = vector.broadcast %cst : f32 to vector<16x128xf32>
    %c0_1 = arith.constant 0 : index
    %c0_2 = arith.constant 0 : index
    %2 = vector.load %arg8[%c0_1, %c0_2] : memref<16x128xf32, #tpu.memory_space<vmem>>, vector<16x128xf32>
    tpu.vector_store %arg8[%c0_1, %c0_2], %1 {strides = array<i32>} : memref<16x128xf32, #tpu.memory_space<vmem>>, vector<16x128xf32>,
    %c0_3 = arith.constant 0 : index
    %c0_4 = arith.constant 0 : index
    %c0_5 = arith.constant 0 : index
    %3 = vector.load %arg2[%c0_3, %c0_4, %c0_5] : memref<4x80x20xf32, #tpu.memory_space<vmem>>, vector<1x80x20xf32>
    %4 = vector.shape_cast %3 : vector<1x80x20xf32> to vector<80x20xf32>
    %cst_6 = arith.constant dense<0.000000e+00> : vector<16x20xf32>
    %5 = tpu.matmul %0, %4, %cst_6 {dimension_numbers = #tpu.dot_dimension_numbers<[1], [0], [0], [1], [0, 0, 1, 1], [], []>} : vector<16x80xf32>, vector<80x20xf32>, vector<16x20xf32> -> vector<16x20xf32>
    %c0_7 = arith.constant 0 : index
    %c0_8 = arith.constant 0 : index
    %c0_9 = arith.constant 0 : index
    %6 = vector.load %arg4[%c0_7, %c0_8, %c0_9] : memref<4x1x20xf32, #tpu.memory_space<vmem>>, vector<1x1x20xf32>
    %7 = vector.shape_cast %6 : vector<1x1x20xf32> to vector<1x20xf32>
    %8 = vector.broadcast %7 : vector<1x20xf32> to vector<16x20xf32>
    %9 = arith.addf %5, %8 : vector<16x20xf32>
    %c0_10 = arith.constant 0 : index
    %c0_11 = arith.constant 0 : index
    %c0_12 = arith.constant 0 : index
    %10 = vector.load %arg3[%c0_10, %c0_11, %c0_12] : memref<4x80x20xf32, #tpu.memory_space<vmem>>, vector<1x80x20xf32>
    %11 = vector.shape_cast %10 : vector<1x80x20xf32> to vector<80x20xf32>
    %cst_13 = arith.constant dense<0.000000e+00> : vector<16x20xf32>
    %12 = tpu.matmul %0, %11, %cst_13 {dimension_numbers = #tpu.dot_dimension_numbers<[1], [0], [0], [1], [0, 0, 1, 1], [], []>} : vector<16x80xf32>, vector<80x20xf32>, vector<16x20xf32> -> vector<16x20xf32>
    %c0_14 = arith.constant 0 : index
    %c0_15 = arith.constant 0 : index
    %c0_16 = arith.constant 0 : index
    %13 = vector.load %arg5[%c0_14, %c0_15, %c0_16] : memref<4x80x128xf32, #tpu.memory_space<vmem>>, vector<1x80x128xf32>
    %14 = vector.shape_cast %13 : vector<1x80x128xf32> to vector<80x128xf32>
    %cst_17 = arith.constant dense<0.000000e+00> : vector<16x128xf32>
    %15 = tpu.matmul %0, %14, %cst_17 {dimension_numbers = #tpu.dot_dimension_numbers<[1], [0], [0], [1], [0, 0, 1, 1], [], []>} : vector<16x80xf32>, vector<80x128xf32>, vector<16x128xf32> -> vector<16x128xf32>
    %cst_18 = arith.constant dense<0.000000e+00> : vector<16x16xf32>
    %16 = tpu.matmul %9, %12, %cst_18 {dimension_numbers = #tpu.dot_dimension_numbers<[1], [1], [0], [0], [0, 0, 1, 0], [], []>} : vector<16x20xf32>, vector<16x20xf32>, vector<16x16xf32> -> vector<16x16xf32>
    %cst_19 = arith.constant dense<0xFF800000> : vector<16xf32>
    %17 = vector.multi_reduction <maximumf>, %16, %cst_19 [1] : vector<16x16xf32> to vector<16xf32>
    %18 = vector.shape_cast %17 : vector<16xf32> to vector<16x1xf32>
    %19 = vector.broadcast %18 : vector<16x1xf32> to vector<16x16xf32>
    %20 = arith.subf %16, %19 : vector<16x16xf32>
    %21 = math.exp %20 : vector<16x16xf32>
    %cst_20 = arith.constant dense<0.000000e+00> : vector<16xf32>
    %22 = vector.multi_reduction <add>, %21, %cst_20 [1] : vector<16x16xf32> to vector<16xf32>
    %23 = vector.shape_cast %22 : vector<16xf32> to vector<16x1xf32>
    %24 = tpu.reciprocal %23 {approx = true} : vector<16x1xf32> -> vector<16x1xf32>
    %25 = vector.broadcast %24 : vector<16x1xf32> to vector<16x16xf32>
    %26 = arith.mulf %21, %25 : vector<16x16xf32>
    %c0_21 = arith.constant 0 : index
    %c0_22 = arith.constant 0 : index
    %27 = vector.load %arg8[%c0_21, %c0_22] : memref<16x128xf32, #tpu.memory_space<vmem>>, vector<16x128xf32>
    %cst_23 = arith.constant dense<0.000000e+00> : vector<16x128xf32>
    %28 = tpu.matmul %26, %15, %cst_23 {dimension_numbers = #tpu.dot_dimension_numbers<[1], [0], [0], [1], [0, 0, 1, 1], [], []>} : vector<16x16xf32>, vector<16x128xf32>, vector<16x128xf32> -> vector<16x128xf32>
    %29 = arith.addf %27, %28 : vector<16x128xf32>
    %c0_24 = arith.constant 0 : index
    %c0_25 = arith.constant 0 : index
    %30 = vector.load %arg8[%c0_24, %c0_25] : memref<16x128xf32, #tpu.memory_space<vmem>>, vector<16x128xf32>
    tpu.vector_store %arg8[%c0_24, %c0_25], %29 {strides = array<i32>} : memref<16x128xf32, #tpu.memory_space<vmem>>, vector<16x128xf32>,
    %c1 = arith.constant 1 : index
    %c0_26 = arith.constant 0 : index
    %c0_27 = arith.constant 0 : index
    %31 = vector.load %arg2[%c1, %c0_26, %c0_27] : memref<4x80x20xf32, #tpu.memory_space<vmem>>, vector<1x80x20xf32>
    %32 = vector.shape_cast %31 : vector<1x80x20xf32> to vector<80x20xf32>
    %cst_28 = arith.constant dense<0.000000e+00> : vector<16x20xf32>
    %33 = tpu.matmul %0, %32, %cst_28 {dimension_numbers = #tpu.dot_dimension_numbers<[1], [0], [0], [1], [0, 0, 1, 1], [], []>} : vector<16x80xf32>, vector<80x20xf32>, vector<16x20xf32> -> vector<16x20xf32>
    %c1_29 = arith.constant 1 : index
    %c0_30 = arith.constant 0 : index
    %c0_31 = arith.constant 0 : index
    %34 = vector.load %arg4[%c1_29, %c0_30, %c0_31] : memref<4x1x20xf32, #tpu.memory_space<vmem>>, vector<1x1x20xf32>
    %35 = vector.shape_cast %34 : vector<1x1x20xf32> to vector<1x20xf32>
    %36 = vector.broadcast %35 : vector<1x20xf32> to vector<16x20xf32>
    %37 = arith.addf %33, %36 : vector<16x20xf32>
    %c1_32 = arith.constant 1 : index
    %c0_33 = arith.constant 0 : index
    %c0_34 = arith.constant 0 : index
    %38 = vector.load %arg3[%c1_32, %c0_33, %c0_34] : memref<4x80x20xf32, #tpu.memory_space<vmem>>, vector<1x80x20xf32>
    %39 = vector.shape_cast %38 : vector<1x80x20xf32> to vector<80x20xf32>
    %cst_35 = arith.constant dense<0.000000e+00> : vector<16x20xf32>
    %40 = tpu.matmul %0, %39, %cst_35 {dimension_numbers = #tpu.dot_dimension_numbers<[1], [0], [0], [1], [0, 0, 1, 1], [], []>} : vector<16x80xf32>, vector<80x20xf32>, vector<16x20xf32> -> vector<16x20xf32>
    %c1_36 = arith.constant 1 : index
    %c0_37 = arith.constant 0 : index
    %c0_38 = arith.constant 0 : index
    %41 = vector.load %arg5[%c1_36, %c0_37, %c0_38] : memref<4x80x128xf32, #tpu.memory_space<vmem>>, vector<1x80x128xf32>
    %42 = vector.shape_cast %41 : vector<1x80x128xf32> to vector<80x128xf32>
    %cst_39 = arith.constant dense<0.000000e+00> : vector<16x128xf32>
    %43 = tpu.matmul %0, %42, %cst_39 {dimension_numbers = #tpu.dot_dimension_numbers<[1], [0], [0], [1], [0, 0, 1, 1], [], []>} : vector<16x80xf32>, vector<80x128xf32>, vector<16x128xf32> -> vector<16x128xf32>
    %cst_40 = arith.constant dense<0.000000e+00> : vector<16x16xf32>
    %44 = tpu.matmul %37, %40, %cst_40 {dimension_numbers = #tpu.dot_dimension_numbers<[1], [1], [0], [0], [0, 0, 1, 0], [], []>} : vector<16x20xf32>, vector<16x20xf32>, vector<16x16xf32> -> vector<16x16xf32>
    %cst_41 = arith.constant dense<0xFF800000> : vector<16xf32>
    %45 = vector.multi_reduction <maximumf>, %44, %cst_41 [1] : vector<16x16xf32> to vector<16xf32>
    %46 = vector.shape_cast %45 : vector<16xf32> to vector<16x1xf32>
    %47 = vector.broadcast %46 : vector<16x1xf32> to vector<16x16xf32>
    %48 = arith.subf %44, %47 : vector<16x16xf32>
    %49 = math.exp %48 : vector<16x16xf32>
    %cst_42 = arith.constant dense<0.000000e+00> : vector<16xf32>
    %50 = vector.multi_reduction <add>, %49, %cst_42 [1] : vector<16x16xf32> to vector<16xf32>
    %51 = vector.shape_cast %50 : vector<16xf32> to vector<16x1xf32>
    %52 = tpu.reciprocal %51 {approx = true} : vector<16x1xf32> -> vector<16x1xf32>
    %53 = vector.broadcast %52 : vector<16x1xf32> to vector<16x16xf32>
    %54 = arith.mulf %49, %53 : vector<16x16xf32>
    %c0_43 = arith.constant 0 : index
    %c0_44 = arith.constant 0 : index
    %55 = vector.load %arg8[%c0_43, %c0_44] : memref<16x128xf32, #tpu.memory_space<vmem>>, vector<16x128xf32>
    %cst_45 = arith.constant dense<0.000000e+00> : vector<16x128xf32>
    %56 = tpu.matmul %54, %43, %cst_45 {dimension_numbers = #tpu.dot_dimension_numbers<[1], [0], [0], [1], [0, 0, 1, 1], [], []>} : vector<16x16xf32>, vector<16x128xf32>, vector<16x128xf32> -> vector<16x128xf32>
    %57 = arith.addf %55, %56 : vector<16x128xf32>
    %c0_46 = arith.constant 0 : index
    %c0_47 = arith.constant 0 : index
    %58 = vector.load %arg8[%c0_46, %c0_47] : memref<16x128xf32, #tpu.memory_space<vmem>>, vector<16x128xf32>
    tpu.vector_store %arg8[%c0_46, %c0_47], %57 {strides = array<i32>} : memref<16x128xf32, #tpu.memory_space<vmem>>, vector<16x128xf32>,
    %c2 = arith.constant 2 : index
    %c0_48 = arith.constant 0 : index
    %c0_49 = arith.constant 0 : index
    %59 = vector.load %arg2[%c2, %c0_48, %c0_49] : memref<4x80x20xf32, #tpu.memory_space<vmem>>, vector<1x80x20xf32>
    %60 = vector.shape_cast %59 : vector<1x80x20xf32> to vector<80x20xf32>
    %cst_50 = arith.constant dense<0.000000e+00> : vector<16x20xf32>
    %61 = tpu.matmul %0, %60, %cst_50 {dimension_numbers = #tpu.dot_dimension_numbers<[1], [0], [0], [1], [0, 0, 1, 1], [], []>} : vector<16x80xf32>, vector<80x20xf32>, vector<16x20xf32> -> vector<16x20xf32>
    %c2_51 = arith.constant 2 : index
    %c0_52 = arith.constant 0 : index
    %c0_53 = arith.constant 0 : index
    %62 = vector.load %arg4[%c2_51, %c0_52, %c0_53] : memref<4x1x20xf32, #tpu.memory_space<vmem>>, vector<1x1x20xf32>
    %63 = vector.shape_cast %62 : vector<1x1x20xf32> to vector<1x20xf32>
    %64 = vector.broadcast %63 : vector<1x20xf32> to vector<16x20xf32>
    %65 = arith.addf %61, %64 : vector<16x20xf32>
    %c2_54 = arith.constant 2 : index
    %c0_55 = arith.constant 0 : index
    %c0_56 = arith.constant 0 : index
    %66 = vector.load %arg3[%c2_54, %c0_55, %c0_56] : memref<4x80x20xf32, #tpu.memory_space<vmem>>, vector<1x80x20xf32>
    %67 = vector.shape_cast %66 : vector<1x80x20xf32> to vector<80x20xf32>
    %cst_57 = arith.constant dense<0.000000e+00> : vector<16x20xf32>
    %68 = tpu.matmul %0, %67, %cst_57 {dimension_numbers = #tpu.dot_dimension_numbers<[1], [0], [0], [1], [0, 0, 1, 1], [], []>} : vector<16x80xf32>, vector<80x20xf32>, vector<16x20xf32> -> vector<16x20xf32>
    %c2_58 = arith.constant 2 : index
    %c0_59 = arith.constant 0 : index
    %c0_60 = arith.constant 0 : index
    %69 = vector.load %arg5[%c2_58, %c0_59, %c0_60] : memref<4x80x128xf32, #tpu.memory_space<vmem>>, vector<1x80x128xf32>
    %70 = vector.shape_cast %69 : vector<1x80x128xf32> to vector<80x128xf32>
    %cst_61 = arith.constant dense<0.000000e+00> : vector<16x128xf32>
    %71 = tpu.matmul %0, %70, %cst_61 {dimension_numbers = #tpu.dot_dimension_numbers<[1], [0], [0], [1], [0, 0, 1, 1], [], []>} : vector<16x80xf32>, vector<80x128xf32>, vector<16x128xf32> -> vector<16x128xf32>
    %cst_62 = arith.constant dense<0.000000e+00> : vector<16x16xf32>
    %72 = tpu.matmul %65, %68, %cst_62 {dimension_numbers = #tpu.dot_dimension_numbers<[1], [1], [0], [0], [0, 0, 1, 0], [], []>} : vector<16x20xf32>, vector<16x20xf32>, vector<16x16xf32> -> vector<16x16xf32>
    %cst_63 = arith.constant dense<0xFF800000> : vector<16xf32>
    %73 = vector.multi_reduction <maximumf>, %72, %cst_63 [1] : vector<16x16xf32> to vector<16xf32>
    %74 = vector.shape_cast %73 : vector<16xf32> to vector<16x1xf32>
    %75 = vector.broadcast %74 : vector<16x1xf32> to vector<16x16xf32>
    %76 = arith.subf %72, %75 : vector<16x16xf32>
    %77 = math.exp %76 : vector<16x16xf32>
    %cst_64 = arith.constant dense<0.000000e+00> : vector<16xf32>
    %78 = vector.multi_reduction <add>, %77, %cst_64 [1] : vector<16x16xf32> to vector<16xf32>
    %79 = vector.shape_cast %78 : vector<16xf32> to vector<16x1xf32>
    %80 = tpu.reciprocal %79 {approx = true} : vector<16x1xf32> -> vector<16x1xf32>
    %81 = vector.broadcast %80 : vector<16x1xf32> to vector<16x16xf32>
    %82 = arith.mulf %77, %81 : vector<16x16xf32>
    %c0_65 = arith.constant 0 : index
    %c0_66 = arith.constant 0 : index
    %83 = vector.load %arg8[%c0_65, %c0_66] : memref<16x128xf32, #tpu.memory_space<vmem>>, vector<16x128xf32>
    %cst_67 = arith.constant dense<0.000000e+00> : vector<16x128xf32>
    %84 = tpu.matmul %82, %71, %cst_67 {dimension_numbers = #tpu.dot_dimension_numbers<[1], [0], [0], [1], [0, 0, 1, 1], [], []>} : vector<16x16xf32>, vector<16x128xf32>, vector<16x128xf32> -> vector<16x128xf32>
    %85 = arith.addf %83, %84 : vector<16x128xf32>
    %c0_68 = arith.constant 0 : index
    %c0_69 = arith.constant 0 : index
    %86 = vector.load %arg8[%c0_68, %c0_69] : memref<16x128xf32, #tpu.memory_space<vmem>>, vector<16x128xf32>
    tpu.vector_store %arg8[%c0_68, %c0_69], %85 {strides = array<i32>} : memref<16x128xf32, #tpu.memory_space<vmem>>, vector<16x128xf32>,
    %c3 = arith.constant 3 : index
    %c0_70 = arith.constant 0 : index
    %c0_71 = arith.constant 0 : index
    %87 = vector.load %arg2[%c3, %c0_70, %c0_71] : memref<4x80x20xf32, #tpu.memory_space<vmem>>, vector<1x80x20xf32>
    %88 = vector.shape_cast %87 : vector<1x80x20xf32> to vector<80x20xf32>
    %cst_72 = arith.constant dense<0.000000e+00> : vector<16x20xf32>
    %89 = tpu.matmul %0, %88, %cst_72 {dimension_numbers = #tpu.dot_dimension_numbers<[1], [0], [0], [1], [0, 0, 1, 1], [], []>} : vector<16x80xf32>, vector<80x20xf32>, vector<16x20xf32> -> vector<16x20xf32>
    %c3_73 = arith.constant 3 : index
    %c0_74 = arith.constant 0 : index
    %c0_75 = arith.constant 0 : index
    %90 = vector.load %arg4[%c3_73, %c0_74, %c0_75] : memref<4x1x20xf32, #tpu.memory_space<vmem>>, vector<1x1x20xf32>
    %91 = vector.shape_cast %90 : vector<1x1x20xf32> to vector<1x20xf32>
    %92 = vector.broadcast %91 : vector<1x20xf32> to vector<16x20xf32>
    %93 = arith.addf %89, %92 : vector<16x20xf32>
    %c3_76 = arith.constant 3 : index
    %c0_77 = arith.constant 0 : index
    %c0_78 = arith.constant 0 : index
    %94 = vector.load %arg3[%c3_76, %c0_77, %c0_78] : memref<4x80x20xf32, #tpu.memory_space<vmem>>, vector<1x80x20xf32>
    %95 = vector.shape_cast %94 : vector<1x80x20xf32> to vector<80x20xf32>
    %cst_79 = arith.constant dense<0.000000e+00> : vector<16x20xf32>
    %96 = tpu.matmul %0, %95, %cst_79 {dimension_numbers = #tpu.dot_dimension_numbers<[1], [0], [0], [1], [0, 0, 1, 1], [], []>} : vector<16x80xf32>, vector<80x20xf32>, vector<16x20xf32> -> vector<16x20xf32>
    %c3_80 = arith.constant 3 : index
    %c0_81 = arith.constant 0 : index
    %c0_82 = arith.constant 0 : index
    %97 = vector.load %arg5[%c3_80, %c0_81, %c0_82] : memref<4x80x128xf32, #tpu.memory_space<vmem>>, vector<1x80x128xf32>
    %98 = vector.shape_cast %97 : vector<1x80x128xf32> to vector<80x128xf32>
    %cst_83 = arith.constant dense<0.000000e+00> : vector<16x128xf32>
    %99 = tpu.matmul %0, %98, %cst_83 {dimension_numbers = #tpu.dot_dimension_numbers<[1], [0], [0], [1], [0, 0, 1, 1], [], []>} : vector<16x80xf32>, vector<80x128xf32>, vector<16x128xf32> -> vector<16x128xf32>
    %cst_84 = arith.constant dense<0.000000e+00> : vector<16x16xf32>
    %100 = tpu.matmul %93, %96, %cst_84 {dimension_numbers = #tpu.dot_dimension_numbers<[1], [1], [0], [0], [0, 0, 1, 0], [], []>} : vector<16x20xf32>, vector<16x20xf32>, vector<16x16xf32> -> vector<16x16xf32>
    %cst_85 = arith.constant dense<0xFF800000> : vector<16xf32>
    %101 = vector.multi_reduction <maximumf>, %100, %cst_85 [1] : vector<16x16xf32> to vector<16xf32>
    %102 = vector.shape_cast %101 : vector<16xf32> to vector<16x1xf32>
    %103 = vector.broadcast %102 : vector<16x1xf32> to vector<16x16xf32>
    %104 = arith.subf %100, %103 : vector<16x16xf32>
    %105 = math.exp %104 : vector<16x16xf32>
    %cst_86 = arith.constant dense<0.000000e+00> : vector<16xf32>
    %106 = vector.multi_reduction <add>, %105, %cst_86 [1] : vector<16x16xf32> to vector<16xf32>
    %107 = vector.shape_cast %106 : vector<16xf32> to vector<16x1xf32>
    %108 = tpu.reciprocal %107 {approx = true} : vector<16x1xf32> -> vector<16x1xf32>
    %109 = vector.broadcast %108 : vector<16x1xf32> to vector<16x16xf32>
    %110 = arith.mulf %105, %109 : vector<16x16xf32>
    %c0_87 = arith.constant 0 : index
    %c0_88 = arith.constant 0 : index
    %111 = vector.load %arg8[%c0_87, %c0_88] : memref<16x128xf32, #tpu.memory_space<vmem>>, vector<16x128xf32>
    %cst_89 = arith.constant dense<0.000000e+00> : vector<16x128xf32>
    %112 = tpu.matmul %110, %99, %cst_89 {dimension_numbers = #tpu.dot_dimension_numbers<[1], [0], [0], [1], [0, 0, 1, 1], [], []>} : vector<16x16xf32>, vector<16x128xf32>, vector<16x128xf32> -> vector<16x128xf32>
    %113 = arith.addf %111, %112 : vector<16x128xf32>
    %c0_90 = arith.constant 0 : index
    %c0_91 = arith.constant 0 : index
    %114 = vector.load %arg8[%c0_90, %c0_91] : memref<16x128xf32, #tpu.memory_space<vmem>>, vector<16x128xf32>
    tpu.vector_store %arg8[%c0_90, %c0_91], %113 {strides = array<i32>} : memref<16x128xf32, #tpu.memory_space<vmem>>, vector<16x128xf32>,
    %c0_92 = arith.constant 0 : index
    %c0_93 = arith.constant 0 : index
    %115 = vector.load %arg8[%c0_92, %c0_93] : memref<16x128xf32, #tpu.memory_space<vmem>>, vector<16x128xf32>
    %c0_94 = arith.constant 0 : index
    %c0_95 = arith.constant 0 : index
    %116 = vector.load %arg6[%c0_94, %c0_95] : memref<1x128xf32, #tpu.memory_space<vmem>>, vector<1x128xf32>
    %117 = vector.broadcast %116 : vector<1x128xf32> to vector<16x128xf32>
    %118 = arith.addf %115, %117 : vector<16x128xf32>
    %c0_96 = arith.constant 0 : index
    %c0_97 = arith.constant 0 : index
    %119 = vector.load %arg7[%c0_96, %c0_97] : memref<16x128xf32, #tpu.memory_space<vmem>>, vector<16x128xf32>
    tpu.vector_store %arg7[%c0_96, %c0_97], %118 {strides = array<i32>} : memref<16x128xf32, #tpu.memory_space<vmem>>, vector<16x128xf32>,
    return
  }
  func.func @transform_0(%arg0: i32) -> (i32, i32) {
    %c0_i32 = arith.constant 0 : i32
    %c0_i32_0 = arith.constant 0 : i32
    return %arg0, %c0_i32 : i32, i32
  }
  func.func @transform_1(%arg0: i32) -> (i32, i32, i32) {
    %c0_i32 = arith.constant 0 : i32
    %c0_i32_0 = arith.constant 0 : i32
    %c0_i32_1 = arith.constant 0 : i32
    %c0_i32_2 = arith.constant 0 : i32
    return %c0_i32, %c0_i32_0, %c0_i32_1 : i32, i32, i32
  }
  func.func @transform_2(%arg0: i32) -> (i32, i32, i32) {
    %c0_i32 = arith.constant 0 : i32
    %c0_i32_0 = arith.constant 0 : i32
    %c0_i32_1 = arith.constant 0 : i32
    %c0_i32_2 = arith.constant 0 : i32
    return %c0_i32, %c0_i32_0, %c0_i32_1 : i32, i32, i32
  }
  func.func @transform_3(%arg0: i32) -> (i32, i32, i32) {
    %c0_i32 = arith.constant 0 : i32
    %c0_i32_0 = arith.constant 0 : i32
    %c0_i32_1 = arith.constant 0 : i32
    %c0_i32_2 = arith.constant 0 : i32
    return %c0_i32, %c0_i32_0, %c0_i32_1 : i32, i32, i32
  }
  func.func @transform_4(%arg0: i32) -> (i32, i32, i32) {
    %c0_i32 = arith.constant 0 : i32
    %c0_i32_0 = arith.constant 0 : i32
    %c0_i32_1 = arith.constant 0 : i32
    %c0_i32_2 = arith.constant 0 : i32
    return %c0_i32, %c0_i32_0, %c0_i32_1 : i32, i32, i32
  }
  func.func @transform_5(%arg0: i32) -> (i32, i32) {
    %c0_i32 = arith.constant 0 : i32
    %c0_i32_0 = arith.constant 0 : i32
    %c0_i32_1 = arith.constant 0 : i32
    return %c0_i32, %c0_i32_0 : i32, i32
  }
  func.func @transform_6(%arg0: i32) -> (i32, i32) {
    %c0_i32 = arith.constant 0 : i32
    %c0_i32_0 = arith.constant 0 : i32
    return %arg0, %c0_i32 : i32, i32
  }
}

</mosaic_0001>

<llo_original>
// kernel: tpu_custom_call.1
$region0: #{tpu_custom_call.1}
  #allocation0 [shape = 'u32[]', space=smem, size = 0x4, offset = 0x4, fixed_abs, tag = 'smem constant byte address 0x4 - core index']
  #allocation1 [shape = 'u32[144,128]{1,0:T(1,128)}', space=vmem, size = 0x12000, scoped, tag = 'internal scratch']
  #allocation2 [shape = 'f32[16,128]{1,0:T(8,128)}', space=vmem, size = 0x2000, scoped, tag = 'scratch operand']
  %s0 = inlined_call_operand.vmem [shape: f32[32,80], index: 0, kind: input, shape index: {}]
  %s1 = inlined_call_operand.vmem [shape: f32[4,80,20], index: 1, kind: input, shape index: {}]
  %s2 = inlined_call_operand.vmem [shape: f32[4,80,20], index: 2, kind: input, shape index: {}]
  %s3 = inlined_call_operand.vmem [shape: f32[4,1,20], index: 3, kind: input, shape index: {}]
  %s4 = inlined_call_operand.vmem [shape: f32[4,80,128], index: 4, kind: input, shape index: {}]
  %s5 = inlined_call_operand.vmem [shape: f32[1,128], index: 5, kind: input, shape index: {}]
  %s6 = inlined_call_operand.hbm [shape: f32[32,128], index: 6, kind: output, shape index: {}]
  %s7 = sld [smem:[#allocation0]]
  $region57: #{tpu_custom_call.1} parent=0
    _
  %s9 = ssub.s32 1, %s7
  %s10 = scalar_select 0, %s9, %s7
  $region1: #{tpu_custom_call.1} parent=0
    #allocation3 [shape = 'u8[16384]{0}', space=vmem, size = 0x4000, scoped, tag = 'output window, operand 0']
    #allocation4 [shape = 's32[2]{0}', space=sflag, size = 0x8, scoped, tag = 'scoped memory for tpu_custom_call.1']
    %11 = vsyncpa [#allocation4], 0
    %s12 = scalar_lea.sflag [#allocation4], 1
    %13 = vsyncpa %s12, 0
    loop: start=0, step=1, limit=4
    $region2: #{tpu_custom_call.1} parent=1 // loop_pre_header
      _
    $region3: #{tpu_custom_call.1} parent=1 // loop_header
      %s15 = sphi 0, %s19
      %p16 = scmp.ge.s32.totalorder %s15, 4
      %s25 = sphi 0, %s27
      %s28 = sphi 0, %s25
      %s29 = sphi 0, %s28
      %s45 = sphi 0, %s29
      %s49 = sphi 0, %s49
      %s51 = sphi 0, %s49
      %s52 = sphi 0, %s51
      %s66 = sphi 0, %s52
      %s70 = sphi 0, %s70
      %s72 = sphi 0, %s70
      %s73 = sphi 0, %s72
      %s87 = sphi 0, %s73
      %s91 = sphi 0, %s91
      %s93 = sphi 0, %s91
      %s94 = sphi 0, %s93
      %s108 = sphi 0, %s94
      %s112 = sphi 0, %s112
      %s114 = sphi 0, %s112
      %s115 = sphi 0, %s114
      %s129 = sphi 0, %s115
      %s133 = sphi 0, %s133
      %s135 = sphi 0, %s133
      %s136 = sphi 0, %s135
      %s150 = sphi 0, %s136
      %s156 = sphi 0, %s158
      %s159 = sphi 0, %s156
      %s160 = sphi 0, %s159
      %s176 = sphi 0, %s160
    $region4: #{tpu_custom_call.1} parent=1 // loop_header_branch
      %18 = sbr.rel (%p16) target = $region8
    $region5: #{tpu_custom_call.1} parent=1 // loop_body
      %s20 = ssub.s32 %s15, 1
      %s21 = ssub.s32 %s15, 2
      %s22 = sadd.s32 %s15, 1
      %s23 = ssub.s32 %s15, %s22
      %p24 = scmp.eq.s32.totalorder %s23, 0
      %s26 = sadd.s32 %s25, 1
      %s27 = scalar_select %p24, %s25, %s26
      %p30 = pneg %p24
      %p31 = scmp.eq.s32.totalorder %s15, 1
      %p32 = por %p30, %p31
      %p33 = scmp.ne.s32.totalorder %s25, %s28
      %p34 = scmp.eq.s32.totalorder %s15, 0
      %p35 = por %p33, %p34
      %p36 = scmp.ne.s32.totalorder %s25, %s28
      %p37 = scmp.eq.s32.totalorder %s20, 1
      %p38 = por %p36, %p37
      %p39 = scmp.ne.s32.totalorder %s28, %s29
      %p40 = scmp.eq.s32.totalorder %s20, 0
      %p41 = por %p39, %p40
      %p42 = scmp.ne.s32.totalorder %s28, %s29
      %p43 = scmp.eq.s32.totalorder %s21, 1
      %p44 = por %p42, %p43
      %p46 = scmp.ne.s32.totalorder %s29, %s45
      %p47 = scmp.eq.s32.totalorder %s21, 0
      %p48 = por %p46, %p47
      %s50 = sadd.s32 %s49, 1
      %p53 = scmp.eq.s32.totalorder %s15, 1
      %p54 = scmp.ne.s32.totalorder %s49, %s51
      %p55 = scmp.eq.s32.totalorder %s15, 0
      %p56 = por %p54, %p55
      %p57 = scmp.ne.s32.totalorder %s49, %s51
      %p58 = scmp.eq.s32.totalorder %s20, 1
      %p59 = por %p57, %p58
      %p60 = scmp.ne.s32.totalorder %s51, %s52
      %p61 = scmp.eq.s32.totalorder %s20, 0
      %p62 = por %p60, %p61
      %p63 = scmp.ne.s32.totalorder %s51, %s52
      %p64 = scmp.eq.s32.totalorder %s21, 1
      %p65 = por %p63, %p64
      %p67 = scmp.ne.s32.totalorder %s52, %s66
      %p68 = scmp.eq.s32.totalorder %s21, 0
      %p69 = por %p67, %p68
      %s71 = sadd.s32 %s70, 1
      %p74 = scmp.eq.s32.totalorder %s15, 1
      %p75 = scmp.ne.s32.totalorder %s70, %s72
      %p76 = scmp.eq.s32.totalorder %s15, 0
      %p77 = por %p75, %p76
      %p78 = scmp.ne.s32.totalorder %s70, %s72
      %p79 = scmp.eq.s32.totalorder %s20, 1
      %p80 = por %p78, %p79
      %p81 = scmp.ne.s32.totalorder %s72, %s73
      %p82 = scmp.eq.s32.totalorder %s20, 0
      %p83 = por %p81, %p82
      %p84 = scmp.ne.s32.totalorder %s72, %s73
      %p85 = scmp.eq.s32.totalorder %s21, 1
      %p86 = por %p84, %p85
      %p88 = scmp.ne.s32.totalorder %s73, %s87
      %p89 = scmp.eq.s32.totalorder %s21, 0
      %p90 = por %p88, %p89
      %s92 = sadd.s32 %s91, 1
      %p95 = scmp.eq.s32.totalorder %s15, 1
      %p96 = scmp.ne.s32.totalorder %s91, %s93
      %p97 = scmp.eq.s32.totalorder %s15, 0
      %p98 = por %p96, %p97
      %p99 = scmp.ne.s32.totalorder %s91, %s93
      %p100 = scmp.eq.s32.totalorder %s20, 1
      %p101 = por %p99, %p100
      %p102 = scmp.ne.s32.totalorder %s93, %s94
      %p103 = scmp.eq.s32.totalorder %s20, 0
      %p104 = por %p102, %p103
      %p105 = scmp.ne.s32.totalorder %s93, %s94
      %p106 = scmp.eq.s32.totalorder %s21, 1
      %p107 = por %p105, %p106
      %p109 = scmp.ne.s32.totalorder %s94, %s108
      %p110 = scmp.eq.s32.totalorder %s21, 0
      %p111 = por %p109, %p110
      %s113 = sadd.s32 %s112, 1
      %p116 = scmp.eq.s32.totalorder %s15, 1
      %p117 = scmp.ne.s32.totalorder %s112, %s114
      %p118 = scmp.eq.s32.totalorder %s15, 0
      %p119 = por %p117, %p118
      %p120 = scmp.ne.s32.totalorder %s112, %s114
      %p121 = scmp.eq.s32.totalorder %s20, 1
      %p122 = por %p120, %p121
      %p123 = scmp.ne.s32.totalorder %s114, %s115
      %p124 = scmp.eq.s32.totalorder %s20, 0
      %p125 = por %p123, %p124
      %p126 = scmp.ne.s32.totalorder %s114, %s115
      %p127 = scmp.eq.s32.totalorder %s21, 1
      %p128 = por %p126, %p127
      %p130 = scmp.ne.s32.totalorder %s115, %s129
      %p131 = scmp.eq.s32.totalorder %s21, 0
      %p132 = por %p130, %p131
      %s134 = sadd.s32 %s133, 1
      %p137 = scmp.eq.s32.totalorder %s15, 1
      %p138 = scmp.ne.s32.totalorder %s133, %s135
      %p139 = scmp.eq.s32.totalorder %s15, 0
      %p140 = por %p138, %p139
      %p141 = scmp.ne.s32.totalorder %s133, %s135
      %p142 = scmp.eq.s32.totalorder %s20, 1
      %p143 = por %p141, %p142
      %p144 = scmp.ne.s32.totalorder %s135, %s136
      %p145 = scmp.eq.s32.totalorder %s20, 0
      %p146 = por %p144, %p145
      %p147 = scmp.ne.s32.totalorder %s135, %s136
      %p148 = scmp.eq.s32.totalorder %s21, 1
      %p149 = por %p147, %p148
      %p151 = scmp.ne.s32.totalorder %s136, %s150
      %p152 = scmp.eq.s32.totalorder %s21, 0
      %p153 = por %p151, %p152
      %s154 = ssub.s32 %s15, %s22
      %p155 = scmp.eq.s32.totalorder %s154, 0
      %s157 = sadd.s32 %s156, 1
      %s158 = scalar_select %p155, %s156, %s157
      %p161 = pneg %p155
      %p162 = scmp.eq.s32.totalorder %s15, 1
      %p163 = por %p161, %p162
      %p164 = scmp.ne.s32.totalorder %s156, %s159
      %p165 = scmp.eq.s32.totalorder %s15, 0
      %p166 = por %p164, %p165
      %p167 = scmp.ne.s32.totalorder %s156, %s159
      %p168 = scmp.eq.s32.totalorder %s20, 1
      %p169 = por %p167, %p168
      %p170 = scmp.ne.s32.totalorder %s159, %s160
      %p171 = scmp.eq.s32.totalorder %s20, 0
      %p172 = por %p170, %p171
      %p173 = scmp.ne.s32.totalorder %s159, %s160
      %p174 = scmp.eq.s32.totalorder %s21, 1
      %p175 = por %p173, %p174
      %p177 = scmp.ne.s32.totalorder %s160, %s176
      %p178 = scmp.eq.s32.totalorder %s21, 0
      %p179 = por %p177, %p178
      %p180 = scmp.le.s32.totalorder 1, %s15
      %p181 = scmp.lt.s32.totalorder %s15, 3
      %p182 = pnand %p180, %p181
      %p183 = pneg %p182
      // Predicated region
      $region9: #{tpu_custom_call.1} parent=5 // pred_check
        _
      $region10: #{tpu_custom_call.1} parent=5 // pred_check_branch
        %185 = sbr.rel (%p182) target = $region12
      $region11: #{tpu_custom_call.1} parent=5 // pred_region
        %s186 = ssub.s32 %s15, 1
        // Predicated region
        $region13: #{tpu_custom_call.1} parent=11 // pred_check
          %p187 = pneg %p62
        $region14: #{tpu_custom_call.1} parent=11 // pred_check_branch
          %189 = sbr.rel (%p187) target = $region16
        $region15: #{tpu_custom_call.1} parent=11 // pred_region
          _
        $region16: #{tpu_custom_call.1} parent=11 // pred_fallthru
          _
        // Predicated region
        $region17: #{tpu_custom_call.1} parent=11 // pred_check
          %p190 = pneg %p83
        $region18: #{tpu_custom_call.1} parent=11 // pred_check_branch
          %192 = sbr.rel (%p190) target = $region20
        $region19: #{tpu_custom_call.1} parent=11 // pred_region
          _
        $region20: #{tpu_custom_call.1} parent=11 // pred_fallthru
          _
        // Predicated region
        $region21: #{tpu_custom_call.1} parent=11 // pred_check
          %p193 = pneg %p104
        $region22: #{tpu_custom_call.1} parent=11 // pred_check_branch
          %195 = sbr.rel (%p193) target = $region24
        $region23: #{tpu_custom_call.1} parent=11 // pred_region
          _
        $region24: #{tpu_custom_call.1} parent=11 // pred_fallthru
          _
        // Predicated region
        $region25: #{tpu_custom_call.1} parent=11 // pred_check
          %p196 = pneg %p125
        $region26: #{tpu_custom_call.1} parent=11 // pred_check_branch
          %198 = sbr.rel (%p196) target = $region28
        $region27: #{tpu_custom_call.1} parent=11 // pred_region
          _
        $region28: #{tpu_custom_call.1} parent=11 // pred_fallthru
          _
        // Predicated region
        $region29: #{tpu_custom_call.1} parent=11 // pred_check
          %p199 = pneg %p146
        $region30: #{tpu_custom_call.1} parent=11 // pred_check_branch
          %201 = sbr.rel (%p199) target = $region32
        $region31: #{tpu_custom_call.1} parent=11 // pred_region
          _
        $region32: #{tpu_custom_call.1} parent=11 // pred_fallthru
          _
      $region12: #{tpu_custom_call.1} parent=5 // pred_fallthru
        _
      %p202 = scmp.lt.s32.totalorder %s15, 2
      // Predicated region
      $region33: #{tpu_custom_call.1} parent=5 // pred_check
        %p203 = pneg %p202
      $region34: #{tpu_custom_call.1} parent=5 // pred_check_branch
        %205 = sbr.rel (%p203) target = $region36
      $region35: #{tpu_custom_call.1} parent=5 // pred_region
        // Predicated region
        $region37: #{tpu_custom_call.1} parent=35 // pred_check
          %p206 = pneg %p35
        $region38: #{tpu_custom_call.1} parent=35 // pred_check_branch
          %208 = sbr.rel (%p206) target = $region40
        $region39: #{tpu_custom_call.1} parent=35 // pred_region
          %s209 = smul.u32 2, %s15
          %p210 = scmp.lt.s32.totalorder %s209, 3
          %s211 = scalar_select %p210, %s209, 3
          %s212 = smul.addr %s211, 8
          %s213 = scalar_lea.vmem %s0, %s212
          %s214 = smul.u32 2, %s15
        $region40: #{tpu_custom_call.1} parent=35 // pred_fallthru
          _
      $region36: #{tpu_custom_call.1} parent=5 // pred_fallthru
        _
      %p215 = scmp.le.s32.totalorder 1, %s15
      %p216 = scmp.lt.s32.totalorder %s15, 3
      %p217 = pnand %p215, %p216
      %p218 = pneg %p217
      // Predicated region
      $region41: #{tpu_custom_call.1} parent=5 // pred_check
        _
      $region42: #{tpu_custom_call.1} parent=5 // pred_check_branch
        %220 = sbr.rel (%p217) target = $region44
      $region43: #{tpu_custom_call.1} parent=5 // pred_region
        %s221 = ssub.s32 %s15, 1
        %s222 = smul.u32 2, %s20
        %p223 = scmp.lt.s32.totalorder %s222, 3
        %s224 = scalar_select %p223, %s222, 3
        %s225 = smul.addr %s224, 8
        %s226 = scalar_lea.vmem %s0, %s225
        %p227 = pneg %p41
        %p228 = pneg %p38
        %p229 = pneg %p62
        %p230 = pneg %p59
        %p231 = pneg %p83
        %p232 = pneg %p80
        %p233 = pneg %p104
        %p234 = pneg %p101
        %p235 = pneg %p125
        %p236 = pneg %p122
        %p237 = pneg %p146
        %p238 = pneg %p143
        %p239 = pneg %p172
        %p240 = pneg %p169
        %s241 = sand.u32 %s159, 1
        %s242 = scalar_lea.sflag [#allocation4], %s241
        %s243 = sand.u32 %s159, 1
        %s244 = smul.addr %s243, 16
        %s245 = scalar_lea.vmem [#allocation3], %s244
        %s246 = smul.u32 2, %s20
        %p247 = scmp.lt.s32.totalorder %s246, 3
        %s248 = scalar_select %p247, %s246, 3
        %s249 = smul.addr %s248, 8
        %s250 = scalar_lea.vmem %s0, %s249
        %s251 = smul.u32 2, %s20
        %s252 = smul.u32 2, %s20
        %v253 = vld [vmem:[%s250] sm:$0xff]
        %v254 = vld [vmem:[%s250 + $0x8] sm:$0xff]
        %255 = vst [vmem:[#allocation2] sm:$0xff] 0.0
        %256 = vst [vmem:[#allocation2 + $0x8] sm:$0xff] 0.0
        %v257 = vld [vmem:[%s1] sm:$0xff]
        %v258 = vld [vmem:[%s1 + $0x8] sm:$0xff]
        %v259 = vld [vmem:[%s1 + $0x10] sm:$0xff]
        %v260 = vld [vmem:[%s1 + $0x18] sm:$0xff]
        %v261 = vld [vmem:[%s1 + $0x20] sm:$0xff]
        %v262 = vld [vmem:[%s1 + $0x28] sm:$0xff]
        %v263 = vld [vmem:[%s1 + $0x30] sm:$0xff]
        %v264 = vld [vmem:[%s1 + $0x38] sm:$0xff]
        %v265 = vld [vmem:[%s1 + $0x40] sm:$0xff]
        %v266 = vld [vmem:[%s1 + $0x48] sm:$0xff]
        %v267 = vld [vmem:[%s3] sm:$0x1]
        %v269 = vlaneseq
        %v270 = vshrl.u32 %v269, 7
        %v271 = vsub.s32 0, %v270
        %v272 = vrot.slane %v267, %v271
        %vm274 = vcmask 654336
        %v276 = vsel %vm274, %v253, 0
        %v279 = vsel %vm274, %v254, 0
        %281 = vmatprep.subr.mxu0 0.0
        %282 = vmatpush1.msra.mxu0 %v257
        %283 = vmatprep.subr.mxu0 0.0
        %284 = vmatpush1.msra.mxu0 %v258
        %285 = vmatprep.subr.mxu0 0.0
        %286 = vmatpush1.msra.mxu0 %v259
        %287 = vmatprep.subr.mxu0 0.0
        %288 = vmatpush1.msra.mxu0 %v260
        %289 = vmatprep.subr.mxu0 0.0
        %290 = vmatpush1.msra.mxu0 %v261
        %291 = vmatprep.subr.mxu0 0.0
        %292 = vmatpush1.msra.mxu0 %v262
        %293 = vmatprep.subr.mxu0 0.0
        %294 = vmatpush1.msra.mxu0 %v263
        %295 = vmatprep.subr.mxu0 0.0
        %296 = vmatpush1.msra.mxu0 %v264
        %297 = vmatprep.subr.mxu0 0.0
        %298 = vmatpush1.msra.mxu0 %v265
        %299 = vmatprep.subr.mxu0 0.0
        %300 = vmatpush1.msra.mxu0 %v266
        %301 = vmatprep.subr.mxu0 0.0
        %302 = vmatpush1.msra.mxu0 0.0
        %303 = vmatprep.subr.mxu0 0.0
        %304 = vmatpush1.msra.mxu0 0.0
        %305 = vmatprep.subr.mxu0 0.0
        %306 = vmatpush1.msra.mxu0 0.0
        %307 = vmatprep.subr.mxu0 0.0
        %308 = vmatpush1.msra.mxu0 0.0
        %309 = vmatprep.subr.mxu0 0.0
        %310 = vmatpush1.msra.mxu0 0.0
        %311 = vmatprep.subr.mxu0 0.0
        %312 = vmatpush1.msra.mxu0 0.0
        %313 = vmatprep.subr.mxu0 0.0
        %314 = vmatpush1.msra.mxu0 0.0
        %315 = vmatprep.subr.mxu0 0.0
        %316 = vmatpush1.msra.mxu0 0.0
        %317 = vmatprep.subr.mxu0 0.0
        %318 = vmatpush1.msra.mxu0 0.0
        %319 = vmatprep.subr.mxu0 0.0
        %320 = vmatpush1.msra.mxu0 0.0
        %321 = vmatprep.subr.mxu0 0.0
        %322 = vmatpush1.msra.mxu0 0.0
        %323 = vmatprep.subr.mxu0 0.0
        %324 = vmatpush1.msra.mxu0 0.0
        %325 = vmatprep.subr.mxu0 0.0
        %326 = vmatpush1.msra.mxu0 0.0
        %327 = vmatprep.subr.mxu0 0.0
        %328 = vmatpush1.msra.mxu0 0.0
        %329 = vmatprep.subr.mxu0 0.0
        %330 = vmatpush1.msra.mxu0 0.0
        %331 = vmatprep.subr.mxu0 0.0
        %332 = vmatpush1.msra.mxu0 0.0
        %333 = vmatprep.subr.mxu0 0.0
        %334 = vmatpush1.msra.mxu0 0.0
        %335 = vmatprep.subr.mxu0 0.0
        %336 = vmatpush1.msra.mxu0 0.0
        %337 = vmatprep.subr.mxu0 0.0
        %338 = vmatpush1.msra.mxu0 0.0
        %339 = vmatprep.subr.mxu0 0.0
        %340 = vmatpush1.msra.mxu0 0.0
        %341 = vmatprep.subr.mxu0 0.0
        %342 = vmatpush1.msra.mxu0 0.0
        %343 = vmatprep.subr.mxu0 0.0
        %344 = vmatpush1.msra.mxu0 0.0
        %345 = vmatprep.mubr.f32.mxu0 0.0
        %346 = vmatmul.mubr.f32.gmra.mrb[0].mxu0 %v276
        %v347 = vpop.f32.mrb[0].mxu0
        %v348 = vadd.f32 %v272, %v347
        %v349 = vpop.f32.mrb[0].mxu0
        %350 = vmatprep.mubr.f32.mxu0 0.0
        %351 = vmatmul.mubr.f32.gmra.mrb[0].mxu0 %v279
        %v352 = vpop.f32.mrb[0].mxu0
        %v353 = vadd.f32 %v272, %v352
        %v354 = vpop.f32.mrb[0].mxu0
        %355 = vdwg.mxu0
        %v356 = vld [vmem:[%s2] sm:$0xff]
        %v357 = vld [vmem:[%s2 + $0x8] sm:$0xff]
        %v358 = vld [vmem:[%s2 + $0x10] sm:$0xff]
        %v359 = vld [vmem:[%s2 + $0x18] sm:$0xff]
        %v360 = vld [vmem:[%s2 + $0x20] sm:$0xff]
        %v361 = vld [vmem:[%s2 + $0x28] sm:$0xff]
        %v362 = vld [vmem:[%s2 + $0x30] sm:$0xff]
        %v363 = vld [vmem:[%s2 + $0x38] sm:$0xff]
        %v364 = vld [vmem:[%s2 + $0x40] sm:$0xff]
        %v365 = vld [vmem:[%s2 + $0x48] sm:$0xff]
        %366 = vmatprep.subr.mxu0 0.0
        %367 = vmatpush1.msra.mxu0 %v356
        %368 = vmatprep.subr.mxu0 0.0
        %369 = vmatpush1.msra.mxu0 %v357
        %370 = vmatprep.subr.mxu0 0.0
        %371 = vmatpush1.msra.mxu0 %v358
        %372 = vmatprep.subr.mxu0 0.0
        %373 = vmatpush1.msra.mxu0 %v359
        %374 = vmatprep.subr.mxu0 0.0
        %375 = vmatpush1.msra.mxu0 %v360
        %376 = vmatprep.subr.mxu0 0.0
        %377 = vmatpush1.msra.mxu0 %v361
        %378 = vmatprep.subr.mxu0 0.0
        %379 = vmatpush1.msra.mxu0 %v362
        %380 = vmatprep.subr.mxu0 0.0
        %381 = vmatpush1.msra.mxu0 %v363
        %382 = vmatprep.subr.mxu0 0.0
        %383 = vmatpush1.msra.mxu0 %v364
        %384 = vmatprep.subr.mxu0 0.0
        %385 = vmatpush1.msra.mxu0 %v365
        %386 = vmatprep.subr.mxu0 0.0
        %387 = vmatpush1.msra.mxu0 0.0
        %388 = vmatprep.subr.mxu0 0.0
        %389 = vmatpush1.msra.mxu0 0.0
        %390 = vmatprep.subr.mxu0 0.0
        %391 = vmatpush1.msra.mxu0 0.0
        %392 = vmatprep.subr.mxu0 0.0
        %393 = vmatpush1.msra.mxu0 0.0
        %394 = vmatprep.subr.mxu0 0.0
        %395 = vmatpush1.msra.mxu0 0.0
        %396 = vmatprep.subr.mxu0 0.0
        %397 = vmatpush1.msra.mxu0 0.0
        %398 = vmatprep.subr.mxu0 0.0
        %399 = vmatpush1.msra.mxu0 0.0
        %400 = vmatprep.subr.mxu0 0.0
        %401 = vmatpush1.msra.mxu0 0.0
        %402 = vmatprep.subr.mxu0 0.0
        %403 = vmatpush1.msra.mxu0 0.0
        %404 = vmatprep.subr.mxu0 0.0
        %405 = vmatpush1.msra.mxu0 0.0
        %406 = vmatprep.subr.mxu0 0.0
        %407 = vmatpush1.msra.mxu0 0.0
        %408 = vmatprep.subr.mxu0 0.0
        %409 = vmatpush1.msra.mxu0 0.0
        %410 = vmatprep.subr.mxu0 0.0
        %411 = vmatpush1.msra.mxu0 0.0
        %412 = vmatprep.subr.mxu0 0.0
        %413 = vmatpush1.msra.mxu0 0.0
        %414 = vmatprep.subr.mxu0 0.0
        %415 = vmatpush1.msra.mxu0 0.0
        %416 = vmatprep.subr.mxu0 0.0
        %417 = vmatpush1.msra.mxu0 0.0
        %418 = vmatprep.subr.mxu0 0.0
        %419 = vmatpush1.msra.mxu0 0.0
        %420 = vmatprep.subr.mxu0 0.0
        %421 = vmatpush1.msra.mxu0 0.0
        %422 = vmatprep.subr.mxu0 0.0
        %423 = vmatpush1.msra.mxu0 0.0
        %424 = vmatprep.subr.mxu0 0.0
        %425 = vmatpush1.msra.mxu0 0.0
        %426 = vmatprep.subr.mxu0 0.0
        %427 = vmatpush1.msra.mxu0 0.0
        %428 = vmatprep.subr.mxu0 0.0
        %429 = vmatpush1.msra.mxu0 0.0
        %430 = vmatprep.mubr.f32.mxu0 0.0
        %431 = vmatmul.mubr.f32.gmra.mrb[0].mxu0 %v276
        %v432 = vpop.f32.mrb[0].mxu0
        %v433 = vadd.f32 0.0, %v432
        %v434 = vpop.f32.mrb[0].mxu0
        %435 = vmatprep.mubr.f32.mxu0 0.0
        %436 = vmatmul.mubr.f32.gmra.mrb[0].mxu0 %v279
        %v437 = vpop.f32.mrb[0].mxu0
        %v438 = vadd.f32 0.0, %v437
        %v439 = vpop.f32.mrb[0].mxu0
        %440 = vdwg.mxu0
        %v441 = vld [vmem:[%s4] sm:$0xff]
        %v442 = vld [vmem:[%s4 + $0x8] sm:$0xff]
        %v443 = vld [vmem:[%s4 + $0x10] sm:$0xff]
        %v444 = vld [vmem:[%s4 + $0x18] sm:$0xff]
        %v445 = vld [vmem:[%s4 + $0x20] sm:$0xff]
        %v446 = vld [vmem:[%s4 + $0x28] sm:$0xff]
        %v447 = vld [vmem:[%s4 + $0x30] sm:$0xff]
        %v448 = vld [vmem:[%s4 + $0x38] sm:$0xff]
        %v449 = vld [vmem:[%s4 + $0x40] sm:$0xff]
        %v450 = vld [vmem:[%s4 + $0x48] sm:$0xff]
        %451 = vmatprep.subr.mxu0 0.0
        %452 = vmatpush1.msra.mxu0 %v441
        %453 = vmatprep.subr.mxu0 0.0
        %454 = vmatpush1.msra.mxu0 %v442
        %455 = vmatprep.subr.mxu0 0.0
        %456 = vmatpush1.msra.mxu0 %v443
        %457 = vmatprep.subr.mxu0 0.0
        %458 = vmatpush1.msra.mxu0 %v444
        %459 = vmatprep.subr.mxu0 0.0
        %460 = vmatpush1.msra.mxu0 %v445
        %461 = vmatprep.subr.mxu0 0.0
        %462 = vmatpush1.msra.mxu0 %v446
        %463 = vmatprep.subr.mxu0 0.0
        %464 = vmatpush1.msra.mxu0 %v447
        %465 = vmatprep.subr.mxu0 0.0
        %466 = vmatpush1.msra.mxu0 %v448
        %467 = vmatprep.subr.mxu0 0.0
        %468 = vmatpush1.msra.mxu0 %v449
        %469 = vmatprep.subr.mxu0 0.0
        %470 = vmatpush1.msra.mxu0 %v450
        %471 = vmatprep.subr.mxu0 0.0
        %472 = vmatpush1.msra.mxu0 0.0
        %473 = vmatprep.subr.mxu0 0.0
        %474 = vmatpush1.msra.mxu0 0.0
        %475 = vmatprep.subr.mxu0 0.0
        %476 = vmatpush1.msra.mxu0 0.0
        %477 = vmatprep.subr.mxu0 0.0
        %478 = vmatpush1.msra.mxu0 0.0
        %479 = vmatprep.subr.mxu0 0.0
        %480 = vmatpush1.msra.mxu0 0.0
        %481 = vmatprep.subr.mxu0 0.0
        %482 = vmatpush1.msra.mxu0 0.0
        %483 = vmatprep.subr.mxu0 0.0
        %484 = vmatpush1.msra.mxu0 0.0
        %485 = vmatprep.subr.mxu0 0.0
        %486 = vmatpush1.msra.mxu0 0.0
        %487 = vmatprep.subr.mxu0 0.0
        %488 = vmatpush1.msra.mxu0 0.0
        %489 = vmatprep.subr.mxu0 0.0
        %490 = vmatpush1.msra.mxu0 0.0
        %491 = vmatprep.subr.mxu0 0.0
        %492 = vmatpush1.msra.mxu0 0.0
        %493 = vmatprep.subr.mxu0 0.0
        %494 = vmatpush1.msra.mxu0 0.0
        %495 = vmatprep.subr.mxu0 0.0
        %496 = vmatpush1.msra.mxu0 0.0
        %497 = vmatprep.subr.mxu0 0.0
        %498 = vmatpush1.msra.mxu0 0.0
        %499 = vmatprep.subr.mxu0 0.0
        %500 = vmatpush1.msra.mxu0 0.0
        %501 = vmatprep.subr.mxu0 0.0
        %502 = vmatpush1.msra.mxu0 0.0
        %503 = vmatprep.subr.mxu0 0.0
        %504 = vmatpush1.msra.mxu0 0.0
        %505 = vmatprep.subr.mxu0 0.0
        %506 = vmatpush1.msra.mxu0 0.0
        %507 = vmatprep.subr.mxu0 0.0
        %508 = vmatpush1.msra.mxu0 0.0
        %509 = vmatprep.subr.mxu0 0.0
        %510 = vmatpush1.msra.mxu0 0.0
        %511 = vmatprep.subr.mxu0 0.0
        %512 = vmatpush1.msra.mxu0 0.0
        %513 = vmatprep.subr.mxu0 0.0
        %514 = vmatpush1.msra.mxu0 0.0
        %515 = vmatprep.mubr.f32.mxu0 0.0
        %516 = vmatmul.mubr.f32.gmra.mrb[0].mxu0 %v276
        %v517 = vpop.f32.mrb[0].mxu0
        %v518 = vadd.f32 0.0, %v517
        %v519 = vpop.f32.mrb[0].mxu0
        %520 = vmatprep.mubr.f32.mxu0 0.0
        %521 = vmatmul.mubr.f32.gmra.mrb[0].mxu0 %v279
        %v522 = vpop.f32.mrb[0].mxu0
        %v523 = vadd.f32 0.0, %v522
        %v524 = vpop.f32.mrb[0].mxu0
        %525 = vdwg.mxu0
        %vm526 = vcmask 162816
        %v528 = vsel %vm526, %v348, 0
        %v531 = vsel %vm526, %v353, 0
        %v534 = vsel %vm526, %v433, 0
        %v537 = vsel %vm526, %v438, 0
        %539 = vmatprep.subr.mxu0 0.0
        %540 = vmatpush1.xpose.msra.mxu0 %v534
        %541 = vmatprep.subr.mxu0 0.0
        %542 = vmatpush1.xpose.msra.mxu0 %v537
        %543 = vmatprep.subr.mxu0 0.0
        %544 = vmatpush1.xpose.msra.mxu0 0.0
        %545 = vmatprep.subr.mxu0 0.0
        %546 = vmatpush1.xpose.msra.mxu0 0.0
        %547 = vmatprep.subr.mxu0 0.0
        %548 = vmatpush1.xpose.msra.mxu0 0.0
        %549 = vmatprep.subr.mxu0 0.0
        %550 = vmatpush1.xpose.msra.mxu0 0.0
        %551 = vmatprep.subr.mxu0 0.0
        %552 = vmatpush1.xpose.msra.mxu0 0.0
        %553 = vmatprep.subr.mxu0 0.0
        %554 = vmatpush1.xpose.msra.mxu0 0.0
        %555 = vmatprep.subr.mxu0 0.0
        %556 = vmatpush1.xpose.msra.mxu0 0.0
        %557 = vmatprep.subr.mxu0 0.0
        %558 = vmatpush1.xpose.msra.mxu0 0.0
        %559 = vmatprep.subr.mxu0 0.0
        %560 = vmatpush1.xpose.msra.mxu0 0.0
        %561 = vmatprep.subr.mxu0 0.0
        %562 = vmatpush1.xpose.msra.mxu0 0.0
        %563 = vmatprep.subr.mxu0 0.0
        %564 = vmatpush1.xpose.msra.mxu0 0.0
        %565 = vmatprep.subr.mxu0 0.0
        %566 = vmatpush1.xpose.msra.mxu0 0.0
        %567 = vmatprep.subr.mxu0 0.0
        %568 = vmatpush1.xpose.msra.mxu0 0.0
        %569 = vmatprep.subr.mxu0 0.0
        %570 = vmatpush1.xpose.msra.mxu0 0.0
        %571 = vmatprep.subr.mxu0 0.0
        %572 = vmatpush1.xpose.msra.mxu0 0.0
        %573 = vmatprep.subr.mxu0 0.0
        %574 = vmatpush1.xpose.msra.mxu0 0.0
        %575 = vmatprep.subr.mxu0 0.0
        %576 = vmatpush1.xpose.msra.mxu0 0.0
        %577 = vmatprep.subr.mxu0 0.0
        %578 = vmatpush1.xpose.msra.mxu0 0.0
        %579 = vmatprep.subr.mxu0 0.0
        %580 = vmatpush1.xpose.msra.mxu0 0.0
        %581 = vmatprep.subr.mxu0 0.0
        %582 = vmatpush1.xpose.msra.mxu0 0.0
        %583 = vmatprep.subr.mxu0 0.0
        %584 = vmatpush1.xpose.msra.mxu0 0.0
        %585 = vmatprep.subr.mxu0 0.0
        %586 = vmatpush1.xpose.msra.mxu0 0.0
        %587 = vmatprep.subr.mxu0 0.0
        %588 = vmatpush1.xpose.msra.mxu0 0.0
        %589 = vmatprep.subr.mxu0 0.0
        %590 = vmatpush1.xpose.msra.mxu0 0.0
        %591 = vmatprep.subr.mxu0 0.0
        %592 = vmatpush1.xpose.msra.mxu0 0.0
        %593 = vmatprep.subr.mxu0 0.0
        %594 = vmatpush1.xpose.msra.mxu0 0.0
        %595 = vmatprep.subr.mxu0 0.0
        %596 = vmatpush1.xpose.msra.mxu0 0.0
        %597 = vmatprep.subr.mxu0 0.0
        %598 = vmatpush1.xpose.msra.mxu0 0.0
        %599 = vmatprep.subr.mxu0 0.0
        %600 = vmatpush1.xpose.msra.mxu0 0.0
        %601 = vmatprep.subr.mxu0 0.0
        %602 = vmatpush1.xpose.msra.mxu0 0.0
        %603 = vmatprep.mubr.f32.mxu0 0.0
        %604 = vmatmul.mubr.f32.gmra.mrb[0].mxu0 %v528
        %v605 = vpop.f32.mrb[0].mxu0
        %v606 = vadd.f32 0.0, %v605
        %v607 = vpop.f32.mrb[0].mxu0
        %608 = vmatprep.mubr.f32.mxu0 0.0
        %609 = vmatmul.mubr.f32.gmra.mrb[0].mxu0 %v531
        %v610 = vpop.f32.mrb[0].mxu0
        %v611 = vadd.f32 0.0, %v610
        %v612 = vpop.f32.mrb[0].mxu0
        %613 = vdwg.mxu0
        %vm614 = vcmask 130048
        %v615 = vsel %vm614, %v606, -inf
        %616 = vmax.xlane.f32.xlu0 %v615
        %v617 = vpop.xlane.xlu0 %616
        %v618 = vsel %vm614, %v611, -inf
        %619 = vmax.xlane.f32.xlu0 %v618
        %v620 = vpop.xlane.xlu0 %619
        %v621 = vsub.f32 %v606, %v617
        %v622 = vsub.f32 %v611, %v620
        %v623 = vmul.f32 %v621, 1.442695
        %v624 = vpow.pop %v623
        %v625 = vmul.f32 %v622, 1.442695
        %v626 = vpow.pop %v625
        %v627 = vsel %vm614, %v624, 0.0
        %628 = vadd.xlane.f32.xlu0 %v627
        %v629 = vpop.xlane.xlu0 %628
        %v630 = vsel %vm614, %v626, 0.0
        %631 = vadd.xlane.f32.xlu0 %v630
        %v632 = vpop.xlane.xlu0 %631
        %v633 = vrcp.pop %v629
        %v634 = vrcp.pop %v632
        %v635 = vmul.f32 %v624, %v633
        %v636 = vmul.f32 %v626, %v634
        %v637 = vld [vmem:[#allocation2] sm:$0xff]
        %v638 = vld [vmem:[#allocation2 + $0x8] sm:$0xff]
        %v640 = vsel %vm614, %v635, 0
        %v643 = vsel %vm614, %v636, 0
        %645 = vmatprep.subr.mxu0 0.0
        %646 = vmatpush1.msra.mxu0 %v518
        %647 = vmatprep.subr.mxu0 0.0
        %648 = vmatpush1.msra.mxu0 %v523
        %649 = vmatprep.subr.mxu0 0.0
        %650 = vmatpush1.msra.mxu0 0.0
        %651 = vmatprep.subr.mxu0 0.0
        %652 = vmatpush1.msra.mxu0 0.0
        %653 = vmatprep.subr.mxu0 0.0
        %654 = vmatpush1.msra.mxu0 0.0
        %655 = vmatprep.subr.mxu0 0.0
        %656 = vmatpush1.msra.mxu0 0.0
        %657 = vmatprep.subr.mxu0 0.0
        %658 = vmatpush1.msra.mxu0 0.0
        %659 = vmatprep.subr.mxu0 0.0
        %660 = vmatpush1.msra.mxu0 0.0
        %661 = vmatprep.subr.mxu0 0.0
        %662 = vmatpush1.msra.mxu0 0.0
        %663 = vmatprep.subr.mxu0 0.0
        %664 = vmatpush1.msra.mxu0 0.0
        %665 = vmatprep.subr.mxu0 0.0
        %666 = vmatpush1.msra.mxu0 0.0
        %667 = vmatprep.subr.mxu0 0.0
        %668 = vmatpush1.msra.mxu0 0.0
        %669 = vmatprep.subr.mxu0 0.0
        %670 = vmatpush1.msra.mxu0 0.0
        %671 = vmatprep.subr.mxu0 0.0
        %672 = vmatpush1.msra.mxu0 0.0
        %673 = vmatprep.subr.mxu0 0.0
        %674 = vmatpush1.msra.mxu0 0.0
        %675 = vmatprep.subr.mxu0 0.0
        %676 = vmatpush1.msra.mxu0 0.0
        %677 = vmatprep.subr.mxu0 0.0
        %678 = vmatpush1.msra.mxu0 0.0
        %679 = vmatprep.subr.mxu0 0.0
        %680 = vmatpush1.msra.mxu0 0.0
        %681 = vmatprep.subr.mxu0 0.0
        %682 = vmatpush1.msra.mxu0 0.0
        %683 = vmatprep.subr.mxu0 0.0
        %684 = vmatpush1.msra.mxu0 0.0
        %685 = vmatprep.subr.mxu0 0.0
        %686 = vmatpush1.msra.mxu0 0.0
        %687 = vmatprep.subr.mxu0 0.0
        %688 = vmatpush1.msra.mxu0 0.0
        %689 = vmatprep.subr.mxu0 0.0
        %690 = vmatpush1.msra.mxu0 0.0
        %691 = vmatprep.subr.mxu0 0.0
        %692 = vmatpush1.msra.mxu0 0.0
        %693 = vmatprep.subr.mxu0 0.0
        %694 = vmatpush1.msra.mxu0 0.0
        %695 = vmatprep.subr.mxu0 0.0
        %696 = vmatpush1.msra.mxu0 0.0
        %697 = vmatprep.subr.mxu0 0.0
        %698 = vmatpush1.msra.mxu0 0.0
        %699 = vmatprep.subr.mxu0 0.0
        %700 = vmatpush1.msra.mxu0 0.0
        %701 = vmatprep.subr.mxu0 0.0
        %702 = vmatpush1.msra.mxu0 0.0
        %703 = vmatprep.subr.mxu0 0.0
        %704 = vmatpush1.msra.mxu0 0.0
        %705 = vmatprep.subr.mxu0 0.0
        %706 = vmatpush1.msra.mxu0 0.0
        %707 = vmatprep.subr.mxu0 0.0
        %708 = vmatpush1.msra.mxu0 0.0
        %709 = vmatprep.mubr.f32.mxu0 0.0
        %710 = vmatmul.mubr.f32.gmra.mrb[0].mxu0 %v640
        %v711 = vpop.f32.mrb[0].mxu0
        %v712 = vadd.f32 0.0, %v711
        %v713 = vpop.f32.mrb[0].mxu0
        %714 = vmatprep.mubr.f32.mxu0 0.0
        %715 = vmatmul.mubr.f32.gmra.mrb[0].mxu0 %v643
        %v716 = vpop.f32.mrb[0].mxu0
        %v717 = vadd.f32 0.0, %v716
        %v718 = vpop.f32.mrb[0].mxu0
        %719 = vdwg.mxu0
        %v720 = vadd.f32 %v637, %v712
        %v721 = vadd.f32 %v638, %v717
        %722 = vst [vmem:[#allocation2] sm:$0xff] %v720
        %723 = vst [vmem:[#allocation2 + $0x8] sm:$0xff] %v721
        %s724 = scalar_lea.vmem %s1, 80
        %v725 = vld [vmem:[%s724] sm:$0xff]
        %v726 = vld [vmem:[%s724 + $0x8] sm:$0xff]
        %v727 = vld [vmem:[%s724 + $0x10] sm:$0xff]
        %v728 = vld [vmem:[%s724 + $0x18] sm:$0xff]
        %v729 = vld [vmem:[%s724 + $0x20] sm:$0xff]
        %v730 = vld [vmem:[%s724 + $0x28] sm:$0xff]
        %v731 = vld [vmem:[%s724 + $0x30] sm:$0xff]
        %v732 = vld [vmem:[%s724 + $0x38] sm:$0xff]
        %v733 = vld [vmem:[%s724 + $0x40] sm:$0xff]
        %v734 = vld [vmem:[%s724 + $0x48] sm:$0xff]
        %s735 = scalar_lea.vmem %s3, 1
        %v736 = vld [vmem:[%s735] sm:$0x1]
        %v738 = vlaneseq
        %v739 = vshrl.u32 %v738, 7
        %v740 = vsub.s32 0, %v739
        %v741 = vrot.slane %v736, %v740
        %743 = vmatprep.subr.mxu0 0.0
        %744 = vmatpush1.msra.mxu0 %v725
        %745 = vmatprep.subr.mxu0 0.0
        %746 = vmatpush1.msra.mxu0 %v726
        %747 = vmatprep.subr.mxu0 0.0
        %748 = vmatpush1.msra.mxu0 %v727
        %749 = vmatprep.subr.mxu0 0.0
        %750 = vmatpush1.msra.mxu0 %v728
        %751 = vmatprep.subr.mxu0 0.0
        %752 = vmatpush1.msra.mxu0 %v729
        %753 = vmatprep.subr.mxu0 0.0
        %754 = vmatpush1.msra.mxu0 %v730
        %755 = vmatprep.subr.mxu0 0.0
        %756 = vmatpush1.msra.mxu0 %v731
        %757 = vmatprep.subr.mxu0 0.0
        %758 = vmatpush1.msra.mxu0 %v732
        %759 = vmatprep.subr.mxu0 0.0
        %760 = vmatpush1.msra.mxu0 %v733
        %761 = vmatprep.subr.mxu0 0.0
        %762 = vmatpush1.msra.mxu0 %v734
        %763 = vmatprep.subr.mxu0 0.0
        %764 = vmatpush1.msra.mxu0 0.0
        %765 = vmatprep.subr.mxu0 0.0
        %766 = vmatpush1.msra.mxu0 0.0
        %767 = vmatprep.subr.mxu0 0.0
        %768 = vmatpush1.msra.mxu0 0.0
        %769 = vmatprep.subr.mxu0 0.0
        %770 = vmatpush1.msra.mxu0 0.0
        %771 = vmatprep.subr.mxu0 0.0
        %772 = vmatpush1.msra.mxu0 0.0
        %773 = vmatprep.subr.mxu0 0.0
        %774 = vmatpush1.msra.mxu0 0.0
        %775 = vmatprep.subr.mxu0 0.0
        %776 = vmatpush1.msra.mxu0 0.0
        %777 = vmatprep.subr.mxu0 0.0
        %778 = vmatpush1.msra.mxu0 0.0
        %779 = vmatprep.subr.mxu0 0.0
        %780 = vmatpush1.msra.mxu0 0.0
        %781 = vmatprep.subr.mxu0 0.0
        %782 = vmatpush1.msra.mxu0 0.0
        %783 = vmatprep.subr.mxu0 0.0
        %784 = vmatpush1.msra.mxu0 0.0
        %785 = vmatprep.subr.mxu0 0.0
        %786 = vmatpush1.msra.mxu0 0.0
        %787 = vmatprep.subr.mxu0 0.0
        %788 = vmatpush1.msra.mxu0 0.0
        %789 = vmatprep.subr.mxu0 0.0
        %790 = vmatpush1.msra.mxu0 0.0
        %791 = vmatprep.subr.mxu0 0.0
        %792 = vmatpush1.msra.mxu0 0.0
        %793 = vmatprep.subr.mxu0 0.0
        %794 = vmatpush1.msra.mxu0 0.0
        %795 = vmatprep.subr.mxu0 0.0
        %796 = vmatpush1.msra.mxu0 0.0
        %797 = vmatprep.subr.mxu0 0.0
        %798 = vmatpush1.msra.mxu0 0.0
        %799 = vmatprep.subr.mxu0 0.0
        %800 = vmatpush1.msra.mxu0 0.0
        %801 = vmatprep.subr.mxu0 0.0
        %802 = vmatpush1.msra.mxu0 0.0
        %803 = vmatprep.subr.mxu0 0.0
        %804 = vmatpush1.msra.mxu0 0.0
        %805 = vmatprep.subr.mxu0 0.0
        %806 = vmatpush1.msra.mxu0 0.0
        %807 = vmatprep.mubr.f32.mxu0 0.0
        %808 = vmatmul.mubr.f32.gmra.mrb[0].mxu0 %v276
        %v809 = vpop.f32.mrb[0].mxu0
        %v810 = vadd.f32 %v741, %v809
        %v811 = vpop.f32.mrb[0].mxu0
        %812 = vmatprep.mubr.f32.mxu0 0.0
        %813 = vmatmul.mubr.f32.gmra.mrb[0].mxu0 %v279
        %v814 = vpop.f32.mrb[0].mxu0
        %v815 = vadd.f32 %v741, %v814
        %v816 = vpop.f32.mrb[0].mxu0
        %817 = vdwg.mxu0
        %s818 = scalar_lea.vmem %s2, 80
        %v819 = vld [vmem:[%s818] sm:$0xff]
        %v820 = vld [vmem:[%s818 + $0x8] sm:$0xff]
        %v821 = vld [vmem:[%s818 + $0x10] sm:$0xff]
        %v822 = vld [vmem:[%s818 + $0x18] sm:$0xff]
        %v823 = vld [vmem:[%s818 + $0x20] sm:$0xff]
        %v824 = vld [vmem:[%s818 + $0x28] sm:$0xff]
        %v825 = vld [vmem:[%s818 + $0x30] sm:$0xff]
        %v826 = vld [vmem:[%s818 + $0x38] sm:$0xff]
        %v827 = vld [vmem:[%s818 + $0x40] sm:$0xff]
        %v828 = vld [vmem:[%s818 + $0x48] sm:$0xff]
        %829 = vmatprep.subr.mxu0 0.0
        %830 = vmatpush1.msra.mxu0 %v819
        %831 = vmatprep.subr.mxu0 0.0
        %832 = vmatpush1.msra.mxu0 %v820
        %833 = vmatprep.subr.mxu0 0.0
        %834 = vmatpush1.msra.mxu0 %v821
        %835 = vmatprep.subr.mxu0 0.0
        %836 = vmatpush1.msra.mxu0 %v822
        %837 = vmatprep.subr.mxu0 0.0
        %838 = vmatpush1.msra.mxu0 %v823
        %839 = vmatprep.subr.mxu0 0.0
        %840 = vmatpush1.msra.mxu0 %v824
        %841 = vmatprep.subr.mxu0 0.0
        %842 = vmatpush1.msra.mxu0 %v825
        %843 = vmatprep.subr.mxu0 0.0
        %844 = vmatpush1.msra.mxu0 %v826
        %845 = vmatprep.subr.mxu0 0.0
        %846 = vmatpush1.msra.mxu0 %v827
        %847 = vmatprep.subr.mxu0 0.0
        %848 = vmatpush1.msra.mxu0 %v828
        %849 = vmatprep.subr.mxu0 0.0
        %850 = vmatpush1.msra.mxu0 0.0
        %851 = vmatprep.subr.mxu0 0.0
        %852 = vmatpush1.msra.mxu0 0.0
        %853 = vmatprep.subr.mxu0 0.0
        %854 = vmatpush1.msra.mxu0 0.0
        %855 = vmatprep.subr.mxu0 0.0
        %856 = vmatpush1.msra.mxu0 0.0
        %857 = vmatprep.subr.mxu0 0.0
        %858 = vmatpush1.msra.mxu0 0.0
        %859 = vmatprep.subr.mxu0 0.0
        %860 = vmatpush1.msra.mxu0 0.0
        %861 = vmatprep.subr.mxu0 0.0
        %862 = vmatpush1.msra.mxu0 0.0
        %863 = vmatprep.subr.mxu0 0.0
        %864 = vmatpush1.msra.mxu0 0.0
        %865 = vmatprep.subr.mxu0 0.0
        %866 = vmatpush1.msra.mxu0 0.0
        %867 = vmatprep.subr.mxu0 0.0
        %868 = vmatpush1.msra.mxu0 0.0
        %869 = vmatprep.subr.mxu0 0.0
        %870 = vmatpush1.msra.mxu0 0.0
        %871 = vmatprep.subr.mxu0 0.0
        %872 = vmatpush1.msra.mxu0 0.0
        %873 = vmatprep.subr.mxu0 0.0
        %874 = vmatpush1.msra.mxu0 0.0
        %875 = vmatprep.subr.mxu0 0.0
        %876 = vmatpush1.msra.mxu0 0.0
        %877 = vmatprep.subr.mxu0 0.0
        %878 = vmatpush1.msra.mxu0 0.0
        %879 = vmatprep.subr.mxu0 0.0
        %880 = vmatpush1.msra.mxu0 0.0
        %881 = vmatprep.subr.mxu0 0.0
        %882 = vmatpush1.msra.mxu0 0.0
        %883 = vmatprep.subr.mxu0 0.0
        %884 = vmatpush1.msra.mxu0 0.0
        %885 = vmatprep.subr.mxu0 0.0
        %886 = vmatpush1.msra.mxu0 0.0
        %887 = vmatprep.subr.mxu0 0.0
        %888 = vmatpush1.msra.mxu0 0.0
        %889 = vmatprep.subr.mxu0 0.0
        %890 = vmatpush1.msra.mxu0 0.0
        %891 = vmatprep.subr.mxu0 0.0
        %892 = vmatpush1.msra.mxu0 0.0
        %893 = vmatprep.mubr.f32.mxu0 0.0
        %894 = vmatmul.mubr.f32.gmra.mrb[0].mxu0 %v276
        %v895 = vpop.f32.mrb[0].mxu0
        %v896 = vadd.f32 0.0, %v895
        %v897 = vpop.f32.mrb[0].mxu0
        %898 = vmatprep.mubr.f32.mxu0 0.0
        %899 = vmatmul.mubr.f32.gmra.mrb[0].mxu0 %v279
        %v900 = vpop.f32.mrb[0].mxu0
        %v901 = vadd.f32 0.0, %v900
        %v902 = vpop.f32.mrb[0].mxu0
        %903 = vdwg.mxu0
        %s904 = scalar_lea.vmem %s4, 80
        %v905 = vld [vmem:[%s904] sm:$0xff]
        %v906 = vld [vmem:[%s904 + $0x8] sm:$0xff]
        %v907 = vld [vmem:[%s904 + $0x10] sm:$0xff]
        %v908 = vld [vmem:[%s904 + $0x18] sm:$0xff]
        %v909 = vld [vmem:[%s904 + $0x20] sm:$0xff]
        %v910 = vld [vmem:[%s904 + $0x28] sm:$0xff]
        %v911 = vld [vmem:[%s904 + $0x30] sm:$0xff]
        %v912 = vld [vmem:[%s904 + $0x38] sm:$0xff]
        %v913 = vld [vmem:[%s904 + $0x40] sm:$0xff]
        %v914 = vld [vmem:[%s904 + $0x48] sm:$0xff]
        %915 = vmatprep.subr.mxu0 0.0
        %916 = vmatpush1.msra.mxu0 %v905
        %917 = vmatprep.subr.mxu0 0.0
        %918 = vmatpush1.msra.mxu0 %v906
        %919 = vmatprep.subr.mxu0 0.0
        %920 = vmatpush1.msra.mxu0 %v907
        %921 = vmatprep.subr.mxu0 0.0
        %922 = vmatpush1.msra.mxu0 %v908
        %923 = vmatprep.subr.mxu0 0.0
        %924 = vmatpush1.msra.mxu0 %v909
        %925 = vmatprep.subr.mxu0 0.0
        %926 = vmatpush1.msra.mxu0 %v910
        %927 = vmatprep.subr.mxu0 0.0
        %928 = vmatpush1.msra.mxu0 %v911
        %929 = vmatprep.subr.mxu0 0.0
        %930 = vmatpush1.msra.mxu0 %v912
        %931 = vmatprep.subr.mxu0 0.0
        %932 = vmatpush1.msra.mxu0 %v913
        %933 = vmatprep.subr.mxu0 0.0
        %934 = vmatpush1.msra.mxu0 %v914
        %935 = vmatprep.subr.mxu0 0.0
        %936 = vmatpush1.msra.mxu0 0.0
        %937 = vmatprep.subr.mxu0 0.0
        %938 = vmatpush1.msra.mxu0 0.0
        %939 = vmatprep.subr.mxu0 0.0
        %940 = vmatpush1.msra.mxu0 0.0
        %941 = vmatprep.subr.mxu0 0.0
        %942 = vmatpush1.msra.mxu0 0.0
        %943 = vmatprep.subr.mxu0 0.0
        %944 = vmatpush1.msra.mxu0 0.0
        %945 = vmatprep.subr.mxu0 0.0
        %946 = vmatpush1.msra.mxu0 0.0
        %947 = vmatprep.subr.mxu0 0.0
        %948 = vmatpush1.msra.mxu0 0.0
        %949 = vmatprep.subr.mxu0 0.0
        %950 = vmatpush1.msra.mxu0 0.0
        %951 = vmatprep.subr.mxu0 0.0
        %952 = vmatpush1.msra.mxu0 0.0
        %953 = vmatprep.subr.mxu0 0.0
        %954 = vmatpush1.msra.mxu0 0.0
        %955 = vmatprep.subr.mxu0 0.0
        %956 = vmatpush1.msra.mxu0 0.0
        %957 = vmatprep.subr.mxu0 0.0
        %958 = vmatpush1.msra.mxu0 0.0
        %959 = vmatprep.subr.mxu0 0.0
        %960 = vmatpush1.msra.mxu0 0.0
        %961 = vmatprep.subr.mxu0 0.0
        %962 = vmatpush1.msra.mxu0 0.0
        %963 = vmatprep.subr.mxu0 0.0
        %964 = vmatpush1.msra.mxu0 0.0
        %965 = vmatprep.subr.mxu0 0.0
        %966 = vmatpush1.msra.mxu0 0.0
        %967 = vmatprep.subr.mxu0 0.0
        %968 = vmatpush1.msra.mxu0 0.0
        %969 = vmatprep.subr.mxu0 0.0
        %970 = vmatpush1.msra.mxu0 0.0
        %971 = vmatprep.subr.mxu0 0.0
        %972 = vmatpush1.msra.mxu0 0.0
        %973 = vmatprep.subr.mxu0 0.0
        %974 = vmatpush1.msra.mxu0 0.0
        %975 = vmatprep.subr.mxu0 0.0
        %976 = vmatpush1.msra.mxu0 0.0
        %977 = vmatprep.subr.mxu0 0.0
        %978 = vmatpush1.msra.mxu0 0.0
        %979 = vmatprep.mubr.f32.mxu0 0.0
        %980 = vmatmul.mubr.f32.gmra.mrb[0].mxu0 %v276
        %v981 = vpop.f32.mrb[0].mxu0
        %v982 = vadd.f32 0.0, %v981
        %v983 = vpop.f32.mrb[0].mxu0
        %984 = vmatprep.mubr.f32.mxu0 0.0
        %985 = vmatmul.mubr.f32.gmra.mrb[0].mxu0 %v279
        %v986 = vpop.f32.mrb[0].mxu0
        %v987 = vadd.f32 0.0, %v986
        %v988 = vpop.f32.mrb[0].mxu0
        %989 = vdwg.mxu0
        %v991 = vsel %vm526, %v810, 0
        %v994 = vsel %vm526, %v815, 0
        %v997 = vsel %vm526, %v896, 0
        %v1000 = vsel %vm526, %v901, 0
        %1002 = vmatprep.subr.mxu0 0.0
        %1003 = vmatpush1.xpose.msra.mxu0 %v997
        %1004 = vmatprep.subr.mxu0 0.0
        %1005 = vmatpush1.xpose.msra.mxu0 %v1000
        %1006 = vmatprep.subr.mxu0 0.0
        %1007 = vmatpush1.xpose.msra.mxu0 0.0
        %1008 = vmatprep.subr.mxu0 0.0
        %1009 = vmatpush1.xpose.msra.mxu0 0.0
        %1010 = vmatprep.subr.mxu0 0.0
        %1011 = vmatpush1.xpose.msra.mxu0 0.0
        %1012 = vmatprep.subr.mxu0 0.0
        %1013 = vmatpush1.xpose.msra.mxu0 0.0
        %1014 = vmatprep.subr.mxu0 0.0
        %1015 = vmatpush1.xpose.msra.mxu0 0.0
        %1016 = vmatprep.subr.mxu0 0.0
        %1017 = vmatpush1.xpose.msra.mxu0 0.0
        %1018 = vmatprep.subr.mxu0 0.0
        %1019 = vmatpush1.xpose.msra.mxu0 0.0
        %1020 = vmatprep.subr.mxu0 0.0
        %1021 = vmatpush1.xpose.msra.mxu0 0.0
        %1022 = vmatprep.subr.mxu0 0.0
        %1023 = vmatpush1.xpose.msra.mxu0 0.0
        %1024 = vmatprep.subr.mxu0 0.0
        %1025 = vmatpush1.xpose.msra.mxu0 0.0
        %1026 = vmatprep.subr.mxu0 0.0
        %1027 = vmatpush1.xpose.msra.mxu0 0.0
        %1028 = vmatprep.subr.mxu0 0.0
        %1029 = vmatpush1.xpose.msra.mxu0 0.0
        %1030 = vmatprep.subr.mxu0 0.0
        %1031 = vmatpush1.xpose.msra.mxu0 0.0
        %1032 = vmatprep.subr.mxu0 0.0
        %1033 = vmatpush1.xpose.msra.mxu0 0.0
        %1034 = vmatprep.subr.mxu0 0.0
        %1035 = vmatpush1.xpose.msra.mxu0 0.0
        %1036 = vmatprep.subr.mxu0 0.0
        %1037 = vmatpush1.xpose.msra.mxu0 0.0
        %1038 = vmatprep.subr.mxu0 0.0
        %1039 = vmatpush1.xpose.msra.mxu0 0.0
        %1040 = vmatprep.subr.mxu0 0.0
        %1041 = vmatpush1.xpose.msra.mxu0 0.0
        %1042 = vmatprep.subr.mxu0 0.0
        %1043 = vmatpush1.xpose.msra.mxu0 0.0
        %1044 = vmatprep.subr.mxu0 0.0
        %1045 = vmatpush1.xpose.msra.mxu0 0.0
        %1046 = vmatprep.subr.mxu0 0.0
        %1047 = vmatpush1.xpose.msra.mxu0 0.0
        %1048 = vmatprep.subr.mxu0 0.0
        %1049 = vmatpush1.xpose.msra.mxu0 0.0
        %1050 = vmatprep.subr.mxu0 0.0
        %1051 = vmatpush1.xpose.msra.mxu0 0.0
        %1052 = vmatprep.subr.mxu0 0.0
        %1053 = vmatpush1.xpose.msra.mxu0 0.0
        %1054 = vmatprep.subr.mxu0 0.0
        %1055 = vmatpush1.xpose.msra.mxu0 0.0
        %1056 = vmatprep.subr.mxu0 0.0
        %1057 = vmatpush1.xpose.msra.mxu0 0.0
        %1058 = vmatprep.subr.mxu0 0.0
        %1059 = vmatpush1.xpose.msra.mxu0 0.0
        %1060 = vmatprep.subr.mxu0 0.0
        %1061 = vmatpush1.xpose.msra.mxu0 0.0
        %1062 = vmatprep.subr.mxu0 0.0
        %1063 = vmatpush1.xpose.msra.mxu0 0.0
        %1064 = vmatprep.subr.mxu0 0.0
        %1065 = vmatpush1.xpose.msra.mxu0 0.0
        %1066 = vmatprep.mubr.f32.mxu0 0.0
        %1067 = vmatmul.mubr.f32.gmra.mrb[0].mxu0 %v991
        %v1068 = vpop.f32.mrb[0].mxu0
        %v1069 = vadd.f32 0.0, %v1068
        %v1070 = vpop.f32.mrb[0].mxu0
        %1071 = vmatprep.mubr.f32.mxu0 0.0
        %1072 = vmatmul.mubr.f32.gmra.mrb[0].mxu0 %v994
        %v1073 = vpop.f32.mrb[0].mxu0
        %v1074 = vadd.f32 0.0, %v1073
        %v1075 = vpop.f32.mrb[0].mxu0
        %1076 = vdwg.mxu0
        %v1077 = vsel %vm614, %v1069, -inf
        %1078 = vmax.xlane.f32.xlu0 %v1077
        %v1079 = vpop.xlane.xlu0 %1078
        %v1080 = vsel %vm614, %v1074, -inf
        %1081 = vmax.xlane.f32.xlu0 %v1080
        %v1082 = vpop.xlane.xlu0 %1081
        %v1083 = vsub.f32 %v1069, %v1079
        %v1084 = vsub.f32 %v1074, %v1082
        %v1085 = vmul.f32 %v1083, 1.442695
        %v1086 = vpow.pop %v1085
        %v1087 = vmul.f32 %v1084, 1.442695
        %v1088 = vpow.pop %v1087
        %v1089 = vsel %vm614, %v1086, 0.0
        %1090 = vadd.xlane.f32.xlu0 %v1089
        %v1091 = vpop.xlane.xlu0 %1090
        %v1092 = vsel %vm614, %v1088, 0.0
        %1093 = vadd.xlane.f32.xlu0 %v1092
        %v1094 = vpop.xlane.xlu0 %1093
        %v1095 = vrcp.pop %v1091
        %v1096 = vrcp.pop %v1094
        %v1097 = vmul.f32 %v1086, %v1095
        %v1098 = vmul.f32 %v1088, %v1096
        %v1099 = vld [vmem:[#allocation2] sm:$0xff]
        %v1100 = vld [vmem:[#allocation2 + $0x8] sm:$0xff]
        %v1102 = vsel %vm614, %v1097, 0
        %v1105 = vsel %vm614, %v1098, 0
        %1107 = vmatprep.subr.mxu0 0.0
        %1108 = vmatpush1.msra.mxu0 %v982
        %1109 = vmatprep.subr.mxu0 0.0
        %1110 = vmatpush1.msra.mxu0 %v987
        %1111 = vmatprep.subr.mxu0 0.0
        %1112 = vmatpush1.msra.mxu0 0.0
        %1113 = vmatprep.subr.mxu0 0.0
        %1114 = vmatpush1.msra.mxu0 0.0
        %1115 = vmatprep.subr.mxu0 0.0
        %1116 = vmatpush1.msra.mxu0 0.0
        %1117 = vmatprep.subr.mxu0 0.0
        %1118 = vmatpush1.msra.mxu0 0.0
        %1119 = vmatprep.subr.mxu0 0.0
        %1120 = vmatpush1.msra.mxu0 0.0
        %1121 = vmatprep.subr.mxu0 0.0
        %1122 = vmatpush1.msra.mxu0 0.0
        %1123 = vmatprep.subr.mxu0 0.0
        %1124 = vmatpush1.msra.mxu0 0.0
        %1125 = vmatprep.subr.mxu0 0.0
        %1126 = vmatpush1.msra.mxu0 0.0
        %1127 = vmatprep.subr.mxu0 0.0
        %1128 = vmatpush1.msra.mxu0 0.0
        %1129 = vmatprep.subr.mxu0 0.0
        %1130 = vmatpush1.msra.mxu0 0.0
        %1131 = vmatprep.subr.mxu0 0.0
        %1132 = vmatpush1.msra.mxu0 0.0
        %1133 = vmatprep.subr.mxu0 0.0
        %1134 = vmatpush1.msra.mxu0 0.0
        %1135 = vmatprep.subr.mxu0 0.0
        %1136 = vmatpush1.msra.mxu0 0.0
        %1137 = vmatprep.subr.mxu0 0.0
        %1138 = vmatpush1.msra.mxu0 0.0
        %1139 = vmatprep.subr.mxu0 0.0
        %1140 = vmatpush1.msra.mxu0 0.0
        %1141 = vmatprep.subr.mxu0 0.0
        %1142 = vmatpush1.msra.mxu0 0.0
        %1143 = vmatprep.subr.mxu0 0.0
        %1144 = vmatpush1.msra.mxu0 0.0
        %1145 = vmatprep.subr.mxu0 0.0
        %1146 = vmatpush1.msra.mxu0 0.0
        %1147 = vmatprep.subr.mxu0 0.0
        %1148 = vmatpush1.msra.mxu0 0.0
        %1149 = vmatprep.subr.mxu0 0.0
        %1150 = vmatpush1.msra.mxu0 0.0
        %1151 = vmatprep.subr.mxu0 0.0
        %1152 = vmatpush1.msra.mxu0 0.0
        %1153 = vmatprep.subr.mxu0 0.0
        %1154 = vmatpush1.msra.mxu0 0.0
        %1155 = vmatprep.subr.mxu0 0.0
        %1156 = vmatpush1.msra.mxu0 0.0
        %1157 = vmatprep.subr.mxu0 0.0
        %1158 = vmatpush1.msra.mxu0 0.0
        %1159 = vmatprep.subr.mxu0 0.0
        %1160 = vmatpush1.msra.mxu0 0.0
        %1161 = vmatprep.subr.mxu0 0.0
        %1162 = vmatpush1.msra.mxu0 0.0
        %1163 = vmatprep.subr.mxu0 0.0
        %1164 = vmatpush1.msra.mxu0 0.0
        %1165 = vmatprep.subr.mxu0 0.0
        %1166 = vmatpush1.msra.mxu0 0.0
        %1167 = vmatprep.subr.mxu0 0.0
        %1168 = vmatpush1.msra.mxu0 0.0
        %1169 = vmatprep.subr.mxu0 0.0
        %1170 = vmatpush1.msra.mxu0 0.0
        %1171 = vmatprep.mubr.f32.mxu0 0.0
        %1172 = vmatmul.mubr.f32.gmra.mrb[0].mxu0 %v1102
        %v1173 = vpop.f32.mrb[0].mxu0
        %v1174 = vadd.f32 0.0, %v1173
        %v1175 = vpop.f32.mrb[0].mxu0
        %1176 = vmatprep.mubr.f32.mxu0 0.0
        %1177 = vmatmul.mubr.f32.gmra.mrb[0].mxu0 %v1105
        %v1178 = vpop.f32.mrb[0].mxu0
        %v1179 = vadd.f32 0.0, %v1178
        %v1180 = vpop.f32.mrb[0].mxu0
        %1181 = vdwg.mxu0
        %v1182 = vadd.f32 %v1099, %v1174
        %v1183 = vadd.f32 %v1100, %v1179
        %1184 = vst [vmem:[#allocation2] sm:$0xff] %v1182
        %1185 = vst [vmem:[#allocation2 + $0x8] sm:$0xff] %v1183
        %s1186 = scalar_lea.vmem %s1, 160
        %v1187 = vld [vmem:[%s1186] sm:$0xff]
        %v1188 = vld [vmem:[%s1186 + $0x8] sm:$0xff]
        %v1189 = vld [vmem:[%s1186 + $0x10] sm:$0xff]
        %v1190 = vld [vmem:[%s1186 + $0x18] sm:$0xff]
        %v1191 = vld [vmem:[%s1186 + $0x20] sm:$0xff]
        %v1192 = vld [vmem:[%s1186 + $0x28] sm:$0xff]
        %v1193 = vld [vmem:[%s1186 + $0x30] sm:$0xff]
        %v1194 = vld [vmem:[%s1186 + $0x38] sm:$0xff]
        %v1195 = vld [vmem:[%s1186 + $0x40] sm:$0xff]
        %v1196 = vld [vmem:[%s1186 + $0x48] sm:$0xff]
        %s1197 = scalar_lea.vmem %s3, 2
        %v1198 = vld [vmem:[%s1197] sm:$0x1]
        %v1200 = vlaneseq
        %v1201 = vshrl.u32 %v1200, 7
        %v1202 = vsub.s32 0, %v1201
        %v1203 = vrot.slane %v1198, %v1202
        %1205 = vmatprep.subr.mxu0 0.0
        %1206 = vmatpush1.msra.mxu0 %v1187
        %1207 = vmatprep.subr.mxu0 0.0
        %1208 = vmatpush1.msra.mxu0 %v1188
        %1209 = vmatprep.subr.mxu0 0.0
        %1210 = vmatpush1.msra.mxu0 %v1189
        %1211 = vmatprep.subr.mxu0 0.0
        %1212 = vmatpush1.msra.mxu0 %v1190
        %1213 = vmatprep.subr.mxu0 0.0
        %1214 = vmatpush1.msra.mxu0 %v1191
        %1215 = vmatprep.subr.mxu0 0.0
        %1216 = vmatpush1.msra.mxu0 %v1192
        %1217 = vmatprep.subr.mxu0 0.0
        %1218 = vmatpush1.msra.mxu0 %v1193
        %1219 = vmatprep.subr.mxu0 0.0
        %1220 = vmatpush1.msra.mxu0 %v1194
        %1221 = vmatprep.subr.mxu0 0.0
        %1222 = vmatpush1.msra.mxu0 %v1195
        %1223 = vmatprep.subr.mxu0 0.0
        %1224 = vmatpush1.msra.mxu0 %v1196
        %1225 = vmatprep.subr.mxu0 0.0
        %1226 = vmatpush1.msra.mxu0 0.0
        %1227 = vmatprep.subr.mxu0 0.0
        %1228 = vmatpush1.msra.mxu0 0.0
        %1229 = vmatprep.subr.mxu0 0.0
        %1230 = vmatpush1.msra.mxu0 0.0
        %1231 = vmatprep.subr.mxu0 0.0
        %1232 = vmatpush1.msra.mxu0 0.0
        %1233 = vmatprep.subr.mxu0 0.0
        %1234 = vmatpush1.msra.mxu0 0.0
        %1235 = vmatprep.subr.mxu0 0.0
        %1236 = vmatpush1.msra.mxu0 0.0
        %1237 = vmatprep.subr.mxu0 0.0
        %1238 = vmatpush1.msra.mxu0 0.0
        %1239 = vmatprep.subr.mxu0 0.0
        %1240 = vmatpush1.msra.mxu0 0.0
        %1241 = vmatprep.subr.mxu0 0.0
        %1242 = vmatpush1.msra.mxu0 0.0
        %1243 = vmatprep.subr.mxu0 0.0
        %1244 = vmatpush1.msra.mxu0 0.0
        %1245 = vmatprep.subr.mxu0 0.0
        %1246 = vmatpush1.msra.mxu0 0.0
        %1247 = vmatprep.subr.mxu0 0.0
        %1248 = vmatpush1.msra.mxu0 0.0
        %1249 = vmatprep.subr.mxu0 0.0
        %1250 = vmatpush1.msra.mxu0 0.0
        %1251 = vmatprep.subr.mxu0 0.0
        %1252 = vmatpush1.msra.mxu0 0.0
        %1253 = vmatprep.subr.mxu0 0.0
        %1254 = vmatpush1.msra.mxu0 0.0
        %1255 = vmatprep.subr.mxu0 0.0
        %1256 = vmatpush1.msra.mxu0 0.0
        %1257 = vmatprep.subr.mxu0 0.0
        %1258 = vmatpush1.msra.mxu0 0.0
        %1259 = vmatprep.subr.mxu0 0.0
        %1260 = vmatpush1.msra.mxu0 0.0
        %1261 = vmatprep.subr.mxu0 0.0
        %1262 = vmatpush1.msra.mxu0 0.0
        %1263 = vmatprep.subr.mxu0 0.0
        %1264 = vmatpush1.msra.mxu0 0.0
        %1265 = vmatprep.subr.mxu0 0.0
        %1266 = vmatpush1.msra.mxu0 0.0
        %1267 = vmatprep.subr.mxu0 0.0
        %1268 = vmatpush1.msra.mxu0 0.0
        %1269 = vmatprep.mubr.f32.mxu0 0.0
        %1270 = vmatmul.mubr.f32.gmra.mrb[0].mxu0 %v276
        %v1271 = vpop.f32.mrb[0].mxu0
        %v1272 = vadd.f32 %v1203, %v1271
        %v1273 = vpop.f32.mrb[0].mxu0
        %1274 = vmatprep.mubr.f32.mxu0 0.0
        %1275 = vmatmul.mubr.f32.gmra.mrb[0].mxu0 %v279
        %v1276 = vpop.f32.mrb[0].mxu0
        %v1277 = vadd.f32 %v1203, %v1276
        %v1278 = vpop.f32.mrb[0].mxu0
        %1279 = vdwg.mxu0
        %s1280 = scalar_lea.vmem %s2, 160
        %v1281 = vld [vmem:[%s1280] sm:$0xff]
        %v1282 = vld [vmem:[%s1280 + $0x8] sm:$0xff]
        %v1283 = vld [vmem:[%s1280 + $0x10] sm:$0xff]
        %v1284 = vld [vmem:[%s1280 + $0x18] sm:$0xff]
        %v1285 = vld [vmem:[%s1280 + $0x20] sm:$0xff]
        %v1286 = vld [vmem:[%s1280 + $0x28] sm:$0xff]
        %v1287 = vld [vmem:[%s1280 + $0x30] sm:$0xff]
        %v1288 = vld [vmem:[%s1280 + $0x38] sm:$0xff]
        %v1289 = vld [vmem:[%s1280 + $0x40] sm:$0xff]
        %v1290 = vld [vmem:[%s1280 + $0x48] sm:$0xff]
        %1291 = vmatprep.subr.mxu0 0.0
        %1292 = vmatpush1.msra.mxu0 %v1281
        %1293 = vmatprep.subr.mxu0 0.0
        %1294 = vmatpush1.msra.mxu0 %v1282
        %1295 = vmatprep.subr.mxu0 0.0
        %1296 = vmatpush1.msra.mxu0 %v1283
        %1297 = vmatprep.subr.mxu0 0.0
        %1298 = vmatpush1.msra.mxu0 %v1284
        %1299 = vmatprep.subr.mxu0 0.0
        %1300 = vmatpush1.msra.mxu0 %v1285
        %1301 = vmatprep.subr.mxu0 0.0
        %1302 = vmatpush1.msra.mxu0 %v1286
        %1303 = vmatprep.subr.mxu0 0.0
        %1304 = vmatpush1.msra.mxu0 %v1287
        %1305 = vmatprep.subr.mxu0 0.0
        %1306 = vmatpush1.msra.mxu0 %v1288
        %1307 = vmatprep.subr.mxu0 0.0
        %1308 = vmatpush1.msra.mxu0 %v1289
        %1309 = vmatprep.subr.mxu0 0.0
        %1310 = vmatpush1.msra.mxu0 %v1290
        %1311 = vmatprep.subr.mxu0 0.0
        %1312 = vmatpush1.msra.mxu0 0.0
        %1313 = vmatprep.subr.mxu0 0.0
        %1314 = vmatpush1.msra.mxu0 0.0
        %1315 = vmatprep.subr.mxu0 0.0
        %1316 = vmatpush1.msra.mxu0 0.0
        %1317 = vmatprep.subr.mxu0 0.0
        %1318 = vmatpush1.msra.mxu0 0.0
        %1319 = vmatprep.subr.mxu0 0.0
        %1320 = vmatpush1.msra.mxu0 0.0
        %1321 = vmatprep.subr.mxu0 0.0
        %1322 = vmatpush1.msra.mxu0 0.0
        %1323 = vmatprep.subr.mxu0 0.0
        %1324 = vmatpush1.msra.mxu0 0.0
        %1325 = vmatprep.subr.mxu0 0.0
        %1326 = vmatpush1.msra.mxu0 0.0
        %1327 = vmatprep.subr.mxu0 0.0
        %1328 = vmatpush1.msra.mxu0 0.0
        %1329 = vmatprep.subr.mxu0 0.0
        %1330 = vmatpush1.msra.mxu0 0.0
        %1331 = vmatprep.subr.mxu0 0.0
        %1332 = vmatpush1.msra.mxu0 0.0
        %1333 = vmatprep.subr.mxu0 0.0
        %1334 = vmatpush1.msra.mxu0 0.0
        %1335 = vmatprep.subr.mxu0 0.0
        %1336 = vmatpush1.msra.mxu0 0.0
        %1337 = vmatprep.subr.mxu0 0.0
        %1338 = vmatpush1.msra.mxu0 0.0
        %1339 = vmatprep.subr.mxu0 0.0
        %1340 = vmatpush1.msra.mxu0 0.0
        %1341 = vmatprep.subr.mxu0 0.0
        %1342 = vmatpush1.msra.mxu0 0.0
        %1343 = vmatprep.subr.mxu0 0.0
        %1344 = vmatpush1.msra.mxu0 0.0
        %1345 = vmatprep.subr.mxu0 0.0
        %1346 = vmatpush1.msra.mxu0 0.0
        %1347 = vmatprep.subr.mxu0 0.0
        %1348 = vmatpush1.msra.mxu0 0.0
        %1349 = vmatprep.subr.mxu0 0.0
        %1350 = vmatpush1.msra.mxu0 0.0
        %1351 = vmatprep.subr.mxu0 0.0
        %1352 = vmatpush1.msra.mxu0 0.0
        %1353 = vmatprep.subr.mxu0 0.0
        %1354 = vmatpush1.msra.mxu0 0.0
        %1355 = vmatprep.mubr.f32.mxu0 0.0
        %1356 = vmatmul.mubr.f32.gmra.mrb[0].mxu0 %v276
        %v1357 = vpop.f32.mrb[0].mxu0
        %v1358 = vadd.f32 0.0, %v1357
        %v1359 = vpop.f32.mrb[0].mxu0
        %1360 = vmatprep.mubr.f32.mxu0 0.0
        %1361 = vmatmul.mubr.f32.gmra.mrb[0].mxu0 %v279
        %v1362 = vpop.f32.mrb[0].mxu0
        %v1363 = vadd.f32 0.0, %v1362
        %v1364 = vpop.f32.mrb[0].mxu0
        %1365 = vdwg.mxu0
        %s1366 = scalar_lea.vmem %s4, 160
        %v1367 = vld [vmem:[%s1366] sm:$0xff]
        %v1368 = vld [vmem:[%s1366 + $0x8] sm:$0xff]
        %v1369 = vld [vmem:[%s1366 + $0x10] sm:$0xff]
        %v1370 = vld [vmem:[%s1366 + $0x18] sm:$0xff]
        %v1371 = vld [vmem:[%s1366 + $0x20] sm:$0xff]
        %v1372 = vld [vmem:[%s1366 + $0x28] sm:$0xff]
        %v1373 = vld [vmem:[%s1366 + $0x30] sm:$0xff]
        %v1374 = vld [vmem:[%s1366 + $0x38] sm:$0xff]
        %v1375 = vld [vmem:[%s1366 + $0x40] sm:$0xff]
        %v1376 = vld [vmem:[%s1366 + $0x48] sm:$0xff]
        %1377 = vmatprep.subr.mxu0 0.0
        %1378 = vmatpush1.msra.mxu0 %v1367
        %1379 = vmatprep.subr.mxu0 0.0
        %1380 = vmatpush1.msra.mxu0 %v1368
        %1381 = vmatprep.subr.mxu0 0.0
        %1382 = vmatpush1.msra.mxu0 %v1369
        %1383 = vmatprep.subr.mxu0 0.0
        %1384 = vmatpush1.msra.mxu0 %v1370
        %1385 = vmatprep.subr.mxu0 0.0
        %1386 = vmatpush1.msra.mxu0 %v1371
        %1387 = vmatprep.subr.mxu0 0.0
        %1388 = vmatpush1.msra.mxu0 %v1372
        %1389 = vmatprep.subr.mxu0 0.0
        %1390 = vmatpush1.msra.mxu0 %v1373
        %1391 = vmatprep.subr.mxu0 0.0
        %1392 = vmatpush1.msra.mxu0 %v1374
        %1393 = vmatprep.subr.mxu0 0.0
        %1394 = vmatpush1.msra.mxu0 %v1375
        %1395 = vmatprep.subr.mxu0 0.0
        %1396 = vmatpush1.msra.mxu0 %v1376
        %1397 = vmatprep.subr.mxu0 0.0
        %1398 = vmatpush1.msra.mxu0 0.0
        %1399 = vmatprep.subr.mxu0 0.0
        %1400 = vmatpush1.msra.mxu0 0.0
        %1401 = vmatprep.subr.mxu0 0.0
        %1402 = vmatpush1.msra.mxu0 0.0
        %1403 = vmatprep.subr.mxu0 0.0
        %1404 = vmatpush1.msra.mxu0 0.0
        %1405 = vmatprep.subr.mxu0 0.0
        %1406 = vmatpush1.msra.mxu0 0.0
        %1407 = vmatprep.subr.mxu0 0.0
        %1408 = vmatpush1.msra.mxu0 0.0
        %1409 = vmatprep.subr.mxu0 0.0
        %1410 = vmatpush1.msra.mxu0 0.0
        %1411 = vmatprep.subr.mxu0 0.0
        %1412 = vmatpush1.msra.mxu0 0.0
        %1413 = vmatprep.subr.mxu0 0.0
        %1414 = vmatpush1.msra.mxu0 0.0
        %1415 = vmatprep.subr.mxu0 0.0
        %1416 = vmatpush1.msra.mxu0 0.0
        %1417 = vmatprep.subr.mxu0 0.0
        %1418 = vmatpush1.msra.mxu0 0.0
        %1419 = vmatprep.subr.mxu0 0.0
        %1420 = vmatpush1.msra.mxu0 0.0
        %1421 = vmatprep.subr.mxu0 0.0
        %1422 = vmatpush1.msra.mxu0 0.0
        %1423 = vmatprep.subr.mxu0 0.0
        %1424 = vmatpush1.msra.mxu0 0.0
        %1425 = vmatprep.subr.mxu0 0.0
        %1426 = vmatpush1.msra.mxu0 0.0
        %1427 = vmatprep.subr.mxu0 0.0
        %1428 = vmatpush1.msra.mxu0 0.0
        %1429 = vmatprep.subr.mxu0 0.0
        %1430 = vmatpush1.msra.mxu0 0.0
        %1431 = vmatprep.subr.mxu0 0.0
        %1432 = vmatpush1.msra.mxu0 0.0
        %1433 = vmatprep.subr.mxu0 0.0
        %1434 = vmatpush1.msra.mxu0 0.0
        %1435 = vmatprep.subr.mxu0 0.0
        %1436 = vmatpush1.msra.mxu0 0.0
        %1437 = vmatprep.subr.mxu0 0.0
        %1438 = vmatpush1.msra.mxu0 0.0
        %1439 = vmatprep.subr.mxu0 0.0
        %1440 = vmatpush1.msra.mxu0 0.0
        %1441 = vmatprep.mubr.f32.mxu0 0.0
        %1442 = vmatmul.mubr.f32.gmra.mrb[0].mxu0 %v276
        %v1443 = vpop.f32.mrb[0].mxu0
        %v1444 = vadd.f32 0.0, %v1443
        %v1445 = vpop.f32.mrb[0].mxu0
        %1446 = vmatprep.mubr.f32.mxu0 0.0
        %1447 = vmatmul.mubr.f32.gmra.mrb[0].mxu0 %v279
        %v1448 = vpop.f32.mrb[0].mxu0
        %v1449 = vadd.f32 0.0, %v1448
        %v1450 = vpop.f32.mrb[0].mxu0
        %1451 = vdwg.mxu0
        %v1453 = vsel %vm526, %v1272, 0
        %v1456 = vsel %vm526, %v1277, 0
        %v1459 = vsel %vm526, %v1358, 0
        %v1462 = vsel %vm526, %v1363, 0
        %1464 = vmatprep.subr.mxu0 0.0
        %1465 = vmatpush1.xpose.msra.mxu0 %v1459
        %1466 = vmatprep.subr.mxu0 0.0
        %1467 = vmatpush1.xpose.msra.mxu0 %v1462
        %1468 = vmatprep.subr.mxu0 0.0
        %1469 = vmatpush1.xpose.msra.mxu0 0.0
        %1470 = vmatprep.subr.mxu0 0.0
        %1471 = vmatpush1.xpose.msra.mxu0 0.0
        %1472 = vmatprep.subr.mxu0 0.0
        %1473 = vmatpush1.xpose.msra.mxu0 0.0
        %1474 = vmatprep.subr.mxu0 0.0
        %1475 = vmatpush1.xpose.msra.mxu0 0.0
        %1476 = vmatprep.subr.mxu0 0.0
        %1477 = vmatpush1.xpose.msra.mxu0 0.0
        %1478 = vmatprep.subr.mxu0 0.0
        %1479 = vmatpush1.xpose.msra.mxu0 0.0
        %1480 = vmatprep.subr.mxu0 0.0
        %1481 = vmatpush1.xpose.msra.mxu0 0.0
        %1482 = vmatprep.subr.mxu0 0.0
        %1483 = vmatpush1.xpose.msra.mxu0 0.0
        %1484 = vmatprep.subr.mxu0 0.0
        %1485 = vmatpush1.xpose.msra.mxu0 0.0
        %1486 = vmatprep.subr.mxu0 0.0
        %1487 = vmatpush1.xpose.msra.mxu0 0.0
        %1488 = vmatprep.subr.mxu0 0.0
        %1489 = vmatpush1.xpose.msra.mxu0 0.0
        %1490 = vmatprep.subr.mxu0 0.0
        %1491 = vmatpush1.xpose.msra.mxu0 0.0
        %1492 = vmatprep.subr.mxu0 0.0
        %1493 = vmatpush1.xpose.msra.mxu0 0.0
        %1494 = vmatprep.subr.mxu0 0.0
        %1495 = vmatpush1.xpose.msra.mxu0 0.0
        %1496 = vmatprep.subr.mxu0 0.0
        %1497 = vmatpush1.xpose.msra.mxu0 0.0
        %1498 = vmatprep.subr.mxu0 0.0
        %1499 = vmatpush1.xpose.msra.mxu0 0.0
        %1500 = vmatprep.subr.mxu0 0.0
        %1501 = vmatpush1.xpose.msra.mxu0 0.0
        %1502 = vmatprep.subr.mxu0 0.0
        %1503 = vmatpush1.xpose.msra.mxu0 0.0
        %1504 = vmatprep.subr.mxu0 0.0
        %1505 = vmatpush1.xpose.msra.mxu0 0.0
        %1506 = vmatprep.subr.mxu0 0.0
        %1507 = vmatpush1.xpose.msra.mxu0 0.0
        %1508 = vmatprep.subr.mxu0 0.0
        %1509 = vmatpush1.xpose.msra.mxu0 0.0
        %1510 = vmatprep.subr.mxu0 0.0
        %1511 = vmatpush1.xpose.msra.mxu0 0.0
        %1512 = vmatprep.subr.mxu0 0.0
        %1513 = vmatpush1.xpose.msra.mxu0 0.0
        %1514 = vmatprep.subr.mxu0 0.0
        %1515 = vmatpush1.xpose.msra.mxu0 0.0
        %1516 = vmatprep.subr.mxu0 0.0
        %1517 = vmatpush1.xpose.msra.mxu0 0.0
        %1518 = vmatprep.subr.mxu0 0.0
        %1519 = vmatpush1.xpose.msra.mxu0 0.0
        %1520 = vmatprep.subr.mxu0 0.0
        %1521 = vmatpush1.xpose.msra.mxu0 0.0
        %1522 = vmatprep.subr.mxu0 0.0
        %1523 = vmatpush1.xpose.msra.mxu0 0.0
        %1524 = vmatprep.subr.mxu0 0.0
        %1525 = vmatpush1.xpose.msra.mxu0 0.0
        %1526 = vmatprep.subr.mxu0 0.0
        %1527 = vmatpush1.xpose.msra.mxu0 0.0
        %1528 = vmatprep.mubr.f32.mxu0 0.0
        %1529 = vmatmul.mubr.f32.gmra.mrb[0].mxu0 %v1453
        %v1530 = vpop.f32.mrb[0].mxu0
        %v1531 = vadd.f32 0.0, %v1530
        %v1532 = vpop.f32.mrb[0].mxu0
        %1533 = vmatprep.mubr.f32.mxu0 0.0
        %1534 = vmatmul.mubr.f32.gmra.mrb[0].mxu0 %v1456
        %v1535 = vpop.f32.mrb[0].mxu0
        %v1536 = vadd.f32 0.0, %v1535
        %v1537 = vpop.f32.mrb[0].mxu0
        %1538 = vdwg.mxu0
        %v1539 = vsel %vm614, %v1531, -inf
        %1540 = vmax.xlane.f32.xlu0 %v1539
        %v1541 = vpop.xlane.xlu0 %1540
        %v1542 = vsel %vm614, %v1536, -inf
        %1543 = vmax.xlane.f32.xlu0 %v1542
        %v1544 = vpop.xlane.xlu0 %1543
        %v1545 = vsub.f32 %v1531, %v1541
        %v1546 = vsub.f32 %v1536, %v1544
        %v1547 = vmul.f32 %v1545, 1.442695
        %v1548 = vpow.pop %v1547
        %v1549 = vmul.f32 %v1546, 1.442695
        %v1550 = vpow.pop %v1549
        %v1551 = vsel %vm614, %v1548, 0.0
        %1552 = vadd.xlane.f32.xlu0 %v1551
        %v1553 = vpop.xlane.xlu0 %1552
        %v1554 = vsel %vm614, %v1550, 0.0
        %1555 = vadd.xlane.f32.xlu0 %v1554
        %v1556 = vpop.xlane.xlu0 %1555
        %v1557 = vrcp.pop %v1553
        %v1558 = vrcp.pop %v1556
        %v1559 = vmul.f32 %v1548, %v1557
        %v1560 = vmul.f32 %v1550, %v1558
        %v1561 = vld [vmem:[#allocation2] sm:$0xff]
        %v1562 = vld [vmem:[#allocation2 + $0x8] sm:$0xff]
        %v1564 = vsel %vm614, %v1559, 0
        %v1567 = vsel %vm614, %v1560, 0
        %1569 = vmatprep.subr.mxu0 0.0
        %1570 = vmatpush1.msra.mxu0 %v1444
        %1571 = vmatprep.subr.mxu0 0.0
        %1572 = vmatpush1.msra.mxu0 %v1449
        %1573 = vmatprep.subr.mxu0 0.0
        %1574 = vmatpush1.msra.mxu0 0.0
        %1575 = vmatprep.subr.mxu0 0.0
        %1576 = vmatpush1.msra.mxu0 0.0
        %1577 = vmatprep.subr.mxu0 0.0
        %1578 = vmatpush1.msra.mxu0 0.0
        %1579 = vmatprep.subr.mxu0 0.0
        %1580 = vmatpush1.msra.mxu0 0.0
        %1581 = vmatprep.subr.mxu0 0.0
        %1582 = vmatpush1.msra.mxu0 0.0
        %1583 = vmatprep.subr.mxu0 0.0
        %1584 = vmatpush1.msra.mxu0 0.0
        %1585 = vmatprep.subr.mxu0 0.0
        %1586 = vmatpush1.msra.mxu0 0.0
        %1587 = vmatprep.subr.mxu0 0.0
        %1588 = vmatpush1.msra.mxu0 0.0
        %1589 = vmatprep.subr.mxu0 0.0
        %1590 = vmatpush1.msra.mxu0 0.0
        %1591 = vmatprep.subr.mxu0 0.0
        %1592 = vmatpush1.msra.mxu0 0.0
        %1593 = vmatprep.subr.mxu0 0.0
        %1594 = vmatpush1.msra.mxu0 0.0
        %1595 = vmatprep.subr.mxu0 0.0
        %1596 = vmatpush1.msra.mxu0 0.0
        %1597 = vmatprep.subr.mxu0 0.0
        %1598 = vmatpush1.msra.mxu0 0.0
        %1599 = vmatprep.subr.mxu0 0.0
        %1600 = vmatpush1.msra.mxu0 0.0
        %1601 = vmatprep.subr.mxu0 0.0
        %1602 = vmatpush1.msra.mxu0 0.0
        %1603 = vmatprep.subr.mxu0 0.0
        %1604 = vmatpush1.msra.mxu0 0.0
        %1605 = vmatprep.subr.mxu0 0.0
        %1606 = vmatpush1.msra.mxu0 0.0
        %1607 = vmatprep.subr.mxu0 0.0
        %1608 = vmatpush1.msra.mxu0 0.0
        %1609 = vmatprep.subr.mxu0 0.0
        %1610 = vmatpush1.msra.mxu0 0.0
        %1611 = vmatprep.subr.mxu0 0.0
        %1612 = vmatpush1.msra.mxu0 0.0
        %1613 = vmatprep.subr.mxu0 0.0
        %1614 = vmatpush1.msra.mxu0 0.0
        %1615 = vmatprep.subr.mxu0 0.0
        %1616 = vmatpush1.msra.mxu0 0.0
        %1617 = vmatprep.subr.mxu0 0.0
        %1618 = vmatpush1.msra.mxu0 0.0
        %1619 = vmatprep.subr.mxu0 0.0
        %1620 = vmatpush1.msra.mxu0 0.0
        %1621 = vmatprep.subr.mxu0 0.0
        %1622 = vmatpush1.msra.mxu0 0.0
        %1623 = vmatprep.subr.mxu0 0.0
        %1624 = vmatpush1.msra.mxu0 0.0
        %1625 = vmatprep.subr.mxu0 0.0
        %1626 = vmatpush1.msra.mxu0 0.0
        %1627 = vmatprep.subr.mxu0 0.0
        %1628 = vmatpush1.msra.mxu0 0.0
        %1629 = vmatprep.subr.mxu0 0.0
        %1630 = vmatpush1.msra.mxu0 0.0
        %1631 = vmatprep.subr.mxu0 0.0
        %1632 = vmatpush1.msra.mxu0 0.0
        %1633 = vmatprep.mubr.f32.mxu0 0.0
        %1634 = vmatmul.mubr.f32.gmra.mrb[0].mxu0 %v1564
        %v1635 = vpop.f32.mrb[0].mxu0
        %v1636 = vadd.f32 0.0, %v1635
        %v1637 = vpop.f32.mrb[0].mxu0
        %1638 = vmatprep.mubr.f32.mxu0 0.0
        %1639 = vmatmul.mubr.f32.gmra.mrb[0].mxu0 %v1567
        %v1640 = vpop.f32.mrb[0].mxu0
        %v1641 = vadd.f32 0.0, %v1640
        %v1642 = vpop.f32.mrb[0].mxu0
        %1643 = vdwg.mxu0
        %v1644 = vadd.f32 %v1561, %v1636
        %v1645 = vadd.f32 %v1562, %v1641
        %1646 = vst [vmem:[#allocation2] sm:$0xff] %v1644
        %1647 = vst [vmem:[#allocation2 + $0x8] sm:$0xff] %v1645
        %s1648 = scalar_lea.vmem %s1, 240
        %v1649 = vld [vmem:[%s1648] sm:$0xff]
        %v1650 = vld [vmem:[%s1648 + $0x8] sm:$0xff]
        %v1651 = vld [vmem:[%s1648 + $0x10] sm:$0xff]
        %v1652 = vld [vmem:[%s1648 + $0x18] sm:$0xff]
        %v1653 = vld [vmem:[%s1648 + $0x20] sm:$0xff]
        %v1654 = vld [vmem:[%s1648 + $0x28] sm:$0xff]
        %v1655 = vld [vmem:[%s1648 + $0x30] sm:$0xff]
        %v1656 = vld [vmem:[%s1648 + $0x38] sm:$0xff]
        %v1657 = vld [vmem:[%s1648 + $0x40] sm:$0xff]
        %v1658 = vld [vmem:[%s1648 + $0x48] sm:$0xff]
        %s1659 = scalar_lea.vmem %s3, 3
        %v1660 = vld [vmem:[%s1659] sm:$0x1]
        %v1662 = vlaneseq
        %v1663 = vshrl.u32 %v1662, 7
        %v1664 = vsub.s32 0, %v1663
        %v1665 = vrot.slane %v1660, %v1664
        %1667 = vmatprep.subr.mxu0 0.0
        %1668 = vmatpush1.msra.mxu0 %v1649
        %1669 = vmatprep.subr.mxu0 0.0
        %1670 = vmatpush1.msra.mxu0 %v1650
        %1671 = vmatprep.subr.mxu0 0.0
        %1672 = vmatpush1.msra.mxu0 %v1651
        %1673 = vmatprep.subr.mxu0 0.0
        %1674 = vmatpush1.msra.mxu0 %v1652
        %1675 = vmatprep.subr.mxu0 0.0
        %1676 = vmatpush1.msra.mxu0 %v1653
        %1677 = vmatprep.subr.mxu0 0.0
        %1678 = vmatpush1.msra.mxu0 %v1654
        %1679 = vmatprep.subr.mxu0 0.0
        %1680 = vmatpush1.msra.mxu0 %v1655
        %1681 = vmatprep.subr.mxu0 0.0
        %1682 = vmatpush1.msra.mxu0 %v1656
        %1683 = vmatprep.subr.mxu0 0.0
        %1684 = vmatpush1.msra.mxu0 %v1657
        %1685 = vmatprep.subr.mxu0 0.0
        %1686 = vmatpush1.msra.mxu0 %v1658
        %1687 = vmatprep.subr.mxu0 0.0
        %1688 = vmatpush1.msra.mxu0 0.0
        %1689 = vmatprep.subr.mxu0 0.0
        %1690 = vmatpush1.msra.mxu0 0.0
        %1691 = vmatprep.subr.mxu0 0.0
        %1692 = vmatpush1.msra.mxu0 0.0
        %1693 = vmatprep.subr.mxu0 0.0
        %1694 = vmatpush1.msra.mxu0 0.0
        %1695 = vmatprep.subr.mxu0 0.0
        %1696 = vmatpush1.msra.mxu0 0.0
        %1697 = vmatprep.subr.mxu0 0.0
        %1698 = vmatpush1.msra.mxu0 0.0
        %1699 = vmatprep.subr.mxu0 0.0
        %1700 = vmatpush1.msra.mxu0 0.0
        %1701 = vmatprep.subr.mxu0 0.0
        %1702 = vmatpush1.msra.mxu0 0.0
        %1703 = vmatprep.subr.mxu0 0.0
        %1704 = vmatpush1.msra.mxu0 0.0
        %1705 = vmatprep.subr.mxu0 0.0
        %1706 = vmatpush1.msra.mxu0 0.0
        %1707 = vmatprep.subr.mxu0 0.0
        %1708 = vmatpush1.msra.mxu0 0.0
        %1709 = vmatprep.subr.mxu0 0.0
        %1710 = vmatpush1.msra.mxu0 0.0
        %1711 = vmatprep.subr.mxu0 0.0
        %1712 = vmatpush1.msra.mxu0 0.0
        %1713 = vmatprep.subr.mxu0 0.0
        %1714 = vmatpush1.msra.mxu0 0.0
        %1715 = vmatprep.subr.mxu0 0.0
        %1716 = vmatpush1.msra.mxu0 0.0
        %1717 = vmatprep.subr.mxu0 0.0
        %1718 = vmatpush1.msra.mxu0 0.0
        %1719 = vmatprep.subr.mxu0 0.0
        %1720 = vmatpush1.msra.mxu0 0.0
        %1721 = vmatprep.subr.mxu0 0.0
        %1722 = vmatpush1.msra.mxu0 0.0
        %1723 = vmatprep.subr.mxu0 0.0
        %1724 = vmatpush1.msra.mxu0 0.0
        %1725 = vmatprep.subr.mxu0 0.0
        %1726 = vmatpush1.msra.mxu0 0.0
        %1727 = vmatprep.subr.mxu0 0.0
        %1728 = vmatpush1.msra.mxu0 0.0
        %1729 = vmatprep.subr.mxu0 0.0
        %1730 = vmatpush1.msra.mxu0 0.0
        %1731 = vmatprep.mubr.f32.mxu0 0.0
        %1732 = vmatmul.mubr.f32.gmra.mrb[0].mxu0 %v276
        %v1733 = vpop.f32.mrb[0].mxu0
        %v1734 = vadd.f32 %v1665, %v1733
        %v1735 = vpop.f32.mrb[0].mxu0
        %1736 = vmatprep.mubr.f32.mxu0 0.0
        %1737 = vmatmul.mubr.f32.gmra.mrb[0].mxu0 %v279
        %v1738 = vpop.f32.mrb[0].mxu0
        %v1739 = vadd.f32 %v1665, %v1738
        %v1740 = vpop.f32.mrb[0].mxu0
        %1741 = vdwg.mxu0
        %s1742 = scalar_lea.vmem %s2, 240
        %v1743 = vld [vmem:[%s1742] sm:$0xff]
        %v1744 = vld [vmem:[%s1742 + $0x8] sm:$0xff]
        %v1745 = vld [vmem:[%s1742 + $0x10] sm:$0xff]
        %v1746 = vld [vmem:[%s1742 + $0x18] sm:$0xff]
        %v1747 = vld [vmem:[%s1742 + $0x20] sm:$0xff]
        %v1748 = vld [vmem:[%s1742 + $0x28] sm:$0xff]
        %v1749 = vld [vmem:[%s1742 + $0x30] sm:$0xff]
        %v1750 = vld [vmem:[%s1742 + $0x38] sm:$0xff]
        %v1751 = vld [vmem:[%s1742 + $0x40] sm:$0xff]
        %v1752 = vld [vmem:[%s1742 + $0x48] sm:$0xff]
        %1753 = vmatprep.subr.mxu0 0.0
        %1754 = vmatpush1.msra.mxu0 %v1743
        %1755 = vmatprep.subr.mxu0 0.0
        %1756 = vmatpush1.msra.mxu0 %v1744
        %1757 = vmatprep.subr.mxu0 0.0
        %1758 = vmatpush1.msra.mxu0 %v1745
        %1759 = vmatprep.subr.mxu0 0.0
        %1760 = vmatpush1.msra.mxu0 %v1746
        %1761 = vmatprep.subr.mxu0 0.0
        %1762 = vmatpush1.msra.mxu0 %v1747
        %1763 = vmatprep.subr.mxu0 0.0
        %1764 = vmatpush1.msra.mxu0 %v1748
        %1765 = vmatprep.subr.mxu0 0.0
        %1766 = vmatpush1.msra.mxu0 %v1749
        %1767 = vmatprep.subr.mxu0 0.0
        %1768 = vmatpush1.msra.mxu0 %v1750
        %1769 = vmatprep.subr.mxu0 0.0
        %1770 = vmatpush1.msra.mxu0 %v1751
        %1771 = vmatprep.subr.mxu0 0.0
        %1772 = vmatpush1.msra.mxu0 %v1752
        %1773 = vmatprep.subr.mxu0 0.0
        %1774 = vmatpush1.msra.mxu0 0.0
        %1775 = vmatprep.subr.mxu0 0.0
        %1776 = vmatpush1.msra.mxu0 0.0
        %1777 = vmatprep.subr.mxu0 0.0
        %1778 = vmatpush1.msra.mxu0 0.0
        %1779 = vmatprep.subr.mxu0 0.0
        %1780 = vmatpush1.msra.mxu0 0.0
        %1781 = vmatprep.subr.mxu0 0.0
        %1782 = vmatpush1.msra.mxu0 0.0
        %1783 = vmatprep.subr.mxu0 0.0
        %1784 = vmatpush1.msra.mxu0 0.0
        %1785 = vmatprep.subr.mxu0 0.0
        %1786 = vmatpush1.msra.mxu0 0.0
        %1787 = vmatprep.subr.mxu0 0.0
        %1788 = vmatpush1.msra.mxu0 0.0
        %1789 = vmatprep.subr.mxu0 0.0
        %1790 = vmatpush1.msra.mxu0 0.0
        %1791 = vmatprep.subr.mxu0 0.0
        %1792 = vmatpush1.msra.mxu0 0.0
        %1793 = vmatprep.subr.mxu0 0.0
        %1794 = vmatpush1.msra.mxu0 0.0
        %1795 = vmatprep.subr.mxu0 0.0
        %1796 = vmatpush1.msra.mxu0 0.0
        %1797 = vmatprep.subr.mxu0 0.0
        %1798 = vmatpush1.msra.mxu0 0.0
        %1799 = vmatprep.subr.mxu0 0.0
        %1800 = vmatpush1.msra.mxu0 0.0
        %1801 = vmatprep.subr.mxu0 0.0
        %1802 = vmatpush1.msra.mxu0 0.0
        %1803 = vmatprep.subr.mxu0 0.0
        %1804 = vmatpush1.msra.mxu0 0.0
        %1805 = vmatprep.subr.mxu0 0.0
        %1806 = vmatpush1.msra.mxu0 0.0
        %1807 = vmatprep.subr.mxu0 0.0
        %1808 = vmatpush1.msra.mxu0 0.0
        %1809 = vmatprep.subr.mxu0 0.0
        %1810 = vmatpush1.msra.mxu0 0.0
        %1811 = vmatprep.subr.mxu0 0.0
        %1812 = vmatpush1.msra.mxu0 0.0
        %1813 = vmatprep.subr.mxu0 0.0
        %1814 = vmatpush1.msra.mxu0 0.0
        %1815 = vmatprep.subr.mxu0 0.0
        %1816 = vmatpush1.msra.mxu0 0.0
        %1817 = vmatprep.mubr.f32.mxu0 0.0
        %1818 = vmatmul.mubr.f32.gmra.mrb[0].mxu0 %v276
        %v1819 = vpop.f32.mrb[0].mxu0
        %v1820 = vadd.f32 0.0, %v1819
        %v1821 = vpop.f32.mrb[0].mxu0
        %1822 = vmatprep.mubr.f32.mxu0 0.0
        %1823 = vmatmul.mubr.f32.gmra.mrb[0].mxu0 %v279
        %v1824 = vpop.f32.mrb[0].mxu0
        %v1825 = vadd.f32 0.0, %v1824
        %v1826 = vpop.f32.mrb[0].mxu0
        %1827 = vdwg.mxu0
        %s1828 = scalar_lea.vmem %s4, 240
        %v1829 = vld [vmem:[%s1828] sm:$0xff]
        %v1830 = vld [vmem:[%s1828 + $0x8] sm:$0xff]
        %v1831 = vld [vmem:[%s1828 + $0x10] sm:$0xff]
        %v1832 = vld [vmem:[%s1828 + $0x18] sm:$0xff]
        %v1833 = vld [vmem:[%s1828 + $0x20] sm:$0xff]
        %v1834 = vld [vmem:[%s1828 + $0x28] sm:$0xff]
        %v1835 = vld [vmem:[%s1828 + $0x30] sm:$0xff]
        %v1836 = vld [vmem:[%s1828 + $0x38] sm:$0xff]
        %v1837 = vld [vmem:[%s1828 + $0x40] sm:$0xff]
        %v1838 = vld [vmem:[%s1828 + $0x48] sm:$0xff]
        %1839 = vmatprep.subr.mxu0 0.0
        %1840 = vmatpush1.msra.mxu0 %v1829
        %1841 = vmatprep.subr.mxu0 0.0
        %1842 = vmatpush1.msra.mxu0 %v1830
        %1843 = vmatprep.subr.mxu0 0.0
        %1844 = vmatpush1.msra.mxu0 %v1831
        %1845 = vmatprep.subr.mxu0 0.0
        %1846 = vmatpush1.msra.mxu0 %v1832
        %1847 = vmatprep.subr.mxu0 0.0
        %1848 = vmatpush1.msra.mxu0 %v1833
        %1849 = vmatprep.subr.mxu0 0.0
        %1850 = vmatpush1.msra.mxu0 %v1834
        %1851 = vmatprep.subr.mxu0 0.0
        %1852 = vmatpush1.msra.mxu0 %v1835
        %1853 = vmatprep.subr.mxu0 0.0
        %1854 = vmatpush1.msra.mxu0 %v1836
        %1855 = vmatprep.subr.mxu0 0.0
        %1856 = vmatpush1.msra.mxu0 %v1837
        %1857 = vmatprep.subr.mxu0 0.0
        %1858 = vmatpush1.msra.mxu0 %v1838
        %1859 = vmatprep.subr.mxu0 0.0
        %1860 = vmatpush1.msra.mxu0 0.0
        %1861 = vmatprep.subr.mxu0 0.0
        %1862 = vmatpush1.msra.mxu0 0.0
        %1863 = vmatprep.subr.mxu0 0.0
        %1864 = vmatpush1.msra.mxu0 0.0
        %1865 = vmatprep.subr.mxu0 0.0
        %1866 = vmatpush1.msra.mxu0 0.0
        %1867 = vmatprep.subr.mxu0 0.0
        %1868 = vmatpush1.msra.mxu0 0.0
        %1869 = vmatprep.subr.mxu0 0.0
        %1870 = vmatpush1.msra.mxu0 0.0
        %1871 = vmatprep.subr.mxu0 0.0
        %1872 = vmatpush1.msra.mxu0 0.0
        %1873 = vmatprep.subr.mxu0 0.0
        %1874 = vmatpush1.msra.mxu0 0.0
        %1875 = vmatprep.subr.mxu0 0.0
        %1876 = vmatpush1.msra.mxu0 0.0
        %1877 = vmatprep.subr.mxu0 0.0
        %1878 = vmatpush1.msra.mxu0 0.0
        %1879 = vmatprep.subr.mxu0 0.0
        %1880 = vmatpush1.msra.mxu0 0.0
        %1881 = vmatprep.subr.mxu0 0.0
        %1882 = vmatpush1.msra.mxu0 0.0
        %1883 = vmatprep.subr.mxu0 0.0
        %1884 = vmatpush1.msra.mxu0 0.0
        %1885 = vmatprep.subr.mxu0 0.0
        %1886 = vmatpush1.msra.mxu0 0.0
        %1887 = vmatprep.subr.mxu0 0.0
        %1888 = vmatpush1.msra.mxu0 0.0
        %1889 = vmatprep.subr.mxu0 0.0
        %1890 = vmatpush1.msra.mxu0 0.0
        %1891 = vmatprep.subr.mxu0 0.0
        %1892 = vmatpush1.msra.mxu0 0.0
        %1893 = vmatprep.subr.mxu0 0.0
        %1894 = vmatpush1.msra.mxu0 0.0
        %1895 = vmatprep.subr.mxu0 0.0
        %1896 = vmatpush1.msra.mxu0 0.0
        %1897 = vmatprep.subr.mxu0 0.0
        %1898 = vmatpush1.msra.mxu0 0.0
        %1899 = vmatprep.subr.mxu0 0.0
        %1900 = vmatpush1.msra.mxu0 0.0
        %1901 = vmatprep.subr.mxu0 0.0
        %1902 = vmatpush1.msra.mxu0 0.0
        %1903 = vmatprep.mubr.f32.mxu0 0.0
        %1904 = vmatmul.mubr.f32.gmra.mrb[0].mxu0 %v276
        %v1905 = vpop.f32.mrb[0].mxu0
        %v1906 = vadd.f32 0.0, %v1905
        %v1907 = vpop.f32.mrb[0].mxu0
        %1908 = vmatprep.mubr.f32.mxu0 0.0
        %1909 = vmatmul.mubr.f32.gmra.mrb[0].mxu0 %v279
        %v1910 = vpop.f32.mrb[0].mxu0
        %v1911 = vadd.f32 0.0, %v1910
        %v1912 = vpop.f32.mrb[0].mxu0
        %1913 = vdwg.mxu0
        %v1915 = vsel %vm526, %v1734, 0
        %v1918 = vsel %vm526, %v1739, 0
        %v1921 = vsel %vm526, %v1820, 0
        %v1924 = vsel %vm526, %v1825, 0
        %1926 = vmatprep.subr.mxu0 0.0
        %1927 = vmatpush1.xpose.msra.mxu0 %v1921
        %1928 = vmatprep.subr.mxu0 0.0
        %1929 = vmatpush1.xpose.msra.mxu0 %v1924
        %1930 = vmatprep.subr.mxu0 0.0
        %1931 = vmatpush1.xpose.msra.mxu0 0.0
        %1932 = vmatprep.subr.mxu0 0.0
        %1933 = vmatpush1.xpose.msra.mxu0 0.0
        %1934 = vmatprep.subr.mxu0 0.0
        %1935 = vmatpush1.xpose.msra.mxu0 0.0
        %1936 = vmatprep.subr.mxu0 0.0
        %1937 = vmatpush1.xpose.msra.mxu0 0.0
        %1938 = vmatprep.subr.mxu0 0.0
        %1939 = vmatpush1.xpose.msra.mxu0 0.0
        %1940 = vmatprep.subr.mxu0 0.0
        %1941 = vmatpush1.xpose.msra.mxu0 0.0
        %1942 = vmatprep.subr.mxu0 0.0
        %1943 = vmatpush1.xpose.msra.mxu0 0.0
        %1944 = vmatprep.subr.mxu0 0.0
        %1945 = vmatpush1.xpose.msra.mxu0 0.0
        %1946 = vmatprep.subr.mxu0 0.0
        %1947 = vmatpush1.xpose.msra.mxu0 0.0
        %1948 = vmatprep.subr.mxu0 0.0
        %1949 = vmatpush1.xpose.msra.mxu0 0.0
        %1950 = vmatprep.subr.mxu0 0.0
        %1951 = vmatpush1.xpose.msra.mxu0 0.0
        %1952 = vmatprep.subr.mxu0 0.0
        %1953 = vmatpush1.xpose.msra.mxu0 0.0
        %1954 = vmatprep.subr.mxu0 0.0
        %1955 = vmatpush1.xpose.msra.mxu0 0.0
        %1956 = vmatprep.subr.mxu0 0.0
        %1957 = vmatpush1.xpose.msra.mxu0 0.0
        %1958 = vmatprep.subr.mxu0 0.0
        %1959 = vmatpush1.xpose.msra.mxu0 0.0
        %1960 = vmatprep.subr.mxu0 0.0
        %1961 = vmatpush1.xpose.msra.mxu0 0.0
        %1962 = vmatprep.subr.mxu0 0.0
        %1963 = vmatpush1.xpose.msra.mxu0 0.0
        %1964 = vmatprep.subr.mxu0 0.0
        %1965 = vmatpush1.xpose.msra.mxu0 0.0
        %1966 = vmatprep.subr.mxu0 0.0
        %1967 = vmatpush1.xpose.msra.mxu0 0.0
        %1968 = vmatprep.subr.mxu0 0.0
        %1969 = vmatpush1.xpose.msra.mxu0 0.0
        %1970 = vmatprep.subr.mxu0 0.0
        %1971 = vmatpush1.xpose.msra.mxu0 0.0
        %1972 = vmatprep.subr.mxu0 0.0
        %1973 = vmatpush1.xpose.msra.mxu0 0.0
        %1974 = vmatprep.subr.mxu0 0.0
        %1975 = vmatpush1.xpose.msra.mxu0 0.0
        %1976 = vmatprep.subr.mxu0 0.0
        %1977 = vmatpush1.xpose.msra.mxu0 0.0
        %1978 = vmatprep.subr.mxu0 0.0
        %1979 = vmatpush1.xpose.msra.mxu0 0.0
        %1980 = vmatprep.subr.mxu0 0.0
        %1981 = vmatpush1.xpose.msra.mxu0 0.0
        %1982 = vmatprep.subr.mxu0 0.0
        %1983 = vmatpush1.xpose.msra.mxu0 0.0
        %1984 = vmatprep.subr.mxu0 0.0
        %1985 = vmatpush1.xpose.msra.mxu0 0.0
        %1986 = vmatprep.subr.mxu0 0.0
        %1987 = vmatpush1.xpose.msra.mxu0 0.0
        %1988 = vmatprep.subr.mxu0 0.0
        %1989 = vmatpush1.xpose.msra.mxu0 0.0
        %1990 = vmatprep.mubr.f32.mxu0 0.0
        %1991 = vmatmul.mubr.f32.gmra.mrb[0].mxu0 %v1915
        %v1992 = vpop.f32.mrb[0].mxu0
        %v1993 = vadd.f32 0.0, %v1992
        %v1994 = vpop.f32.mrb[0].mxu0
        %1995 = vmatprep.mubr.f32.mxu0 0.0
        %1996 = vmatmul.mubr.f32.gmra.mrb[0].mxu0 %v1918
        %v1997 = vpop.f32.mrb[0].mxu0
        %v1998 = vadd.f32 0.0, %v1997
        %v1999 = vpop.f32.mrb[0].mxu0
        %2000 = vdwg.mxu0
        %v2001 = vsel %vm614, %v1993, -inf
        %2002 = vmax.xlane.f32.xlu0 %v2001
        %v2003 = vpop.xlane.xlu0 %2002
        %v2004 = vsel %vm614, %v1998, -inf
        %2005 = vmax.xlane.f32.xlu0 %v2004
        %v2006 = vpop.xlane.xlu0 %2005
        %v2007 = vsub.f32 %v1993, %v2003
        %v2008 = vsub.f32 %v1998, %v2006
        %v2009 = vmul.f32 %v2007, 1.442695
        %v2010 = vpow.pop %v2009
        %v2011 = vmul.f32 %v2008, 1.442695
        %v2012 = vpow.pop %v2011
        %v2013 = vsel %vm614, %v2010, 0.0
        %2014 = vadd.xlane.f32.xlu0 %v2013
        %v2015 = vpop.xlane.xlu0 %2014
        %v2016 = vsel %vm614, %v2012, 0.0
        %2017 = vadd.xlane.f32.xlu0 %v2016
        %v2018 = vpop.xlane.xlu0 %2017
        %v2019 = vrcp.pop %v2015
        %v2020 = vrcp.pop %v2018
        %v2021 = vmul.f32 %v2010, %v2019
        %v2022 = vmul.f32 %v2012, %v2020
        %v2023 = vld [vmem:[#allocation2] sm:$0xff]
        %v2024 = vld [vmem:[#allocation2 + $0x8] sm:$0xff]
        %v2026 = vsel %vm614, %v2021, 0
        %v2029 = vsel %vm614, %v2022, 0
        %2031 = vmatprep.subr.mxu0 0.0
        %2032 = vmatpush1.msra.mxu0 %v1906
        %2033 = vmatprep.subr.mxu0 0.0
        %2034 = vmatpush1.msra.mxu0 %v1911
        %2035 = vmatprep.subr.mxu0 0.0
        %2036 = vmatpush1.msra.mxu0 0.0
        %2037 = vmatprep.subr.mxu0 0.0
        %2038 = vmatpush1.msra.mxu0 0.0
        %2039 = vmatprep.subr.mxu0 0.0
        %2040 = vmatpush1.msra.mxu0 0.0
        %2041 = vmatprep.subr.mxu0 0.0
        %2042 = vmatpush1.msra.mxu0 0.0
        %2043 = vmatprep.subr.mxu0 0.0
        %2044 = vmatpush1.msra.mxu0 0.0
        %2045 = vmatprep.subr.mxu0 0.0
        %2046 = vmatpush1.msra.mxu0 0.0
        %2047 = vmatprep.subr.mxu0 0.0
        %2048 = vmatpush1.msra.mxu0 0.0
        %2049 = vmatprep.subr.mxu0 0.0
        %2050 = vmatpush1.msra.mxu0 0.0
        %2051 = vmatprep.subr.mxu0 0.0
        %2052 = vmatpush1.msra.mxu0 0.0
        %2053 = vmatprep.subr.mxu0 0.0
        %2054 = vmatpush1.msra.mxu0 0.0
        %2055 = vmatprep.subr.mxu0 0.0
        %2056 = vmatpush1.msra.mxu0 0.0
        %2057 = vmatprep.subr.mxu0 0.0
        %2058 = vmatpush1.msra.mxu0 0.0
        %2059 = vmatprep.subr.mxu0 0.0
        %2060 = vmatpush1.msra.mxu0 0.0
        %2061 = vmatprep.subr.mxu0 0.0
        %2062 = vmatpush1.msra.mxu0 0.0
        %2063 = vmatprep.subr.mxu0 0.0
        %2064 = vmatpush1.msra.mxu0 0.0
        %2065 = vmatprep.subr.mxu0 0.0
        %2066 = vmatpush1.msra.mxu0 0.0
        %2067 = vmatprep.subr.mxu0 0.0
        %2068 = vmatpush1.msra.mxu0 0.0
        %2069 = vmatprep.subr.mxu0 0.0
        %2070 = vmatpush1.msra.mxu0 0.0
        %2071 = vmatprep.subr.mxu0 0.0
        %2072 = vmatpush1.msra.mxu0 0.0
        %2073 = vmatprep.subr.mxu0 0.0
        %2074 = vmatpush1.msra.mxu0 0.0
        %2075 = vmatprep.subr.mxu0 0.0
        %2076 = vmatpush1.msra.mxu0 0.0
        %2077 = vmatprep.subr.mxu0 0.0
        %2078 = vmatpush1.msra.mxu0 0.0
        %2079 = vmatprep.subr.mxu0 0.0
        %2080 = vmatpush1.msra.mxu0 0.0
        %2081 = vmatprep.subr.mxu0 0.0
        %2082 = vmatpush1.msra.mxu0 0.0
        %2083 = vmatprep.subr.mxu0 0.0
        %2084 = vmatpush1.msra.mxu0 0.0
        %2085 = vmatprep.subr.mxu0 0.0
        %2086 = vmatpush1.msra.mxu0 0.0
        %2087 = vmatprep.subr.mxu0 0.0
        %2088 = vmatpush1.msra.mxu0 0.0
        %2089 = vmatprep.subr.mxu0 0.0
        %2090 = vmatpush1.msra.mxu0 0.0
        %2091 = vmatprep.subr.mxu0 0.0
        %2092 = vmatpush1.msra.mxu0 0.0
        %2093 = vmatprep.subr.mxu0 0.0
        %2094 = vmatpush1.msra.mxu0 0.0
        %2095 = vmatprep.mubr.f32.mxu0 0.0
        %2096 = vmatmul.mubr.f32.gmra.mrb[0].mxu0 %v2026
        %v2097 = vpop.f32.mrb[0].mxu0
        %v2098 = vadd.f32 0.0, %v2097
        %v2099 = vpop.f32.mrb[0].mxu0
        %2100 = vmatprep.mubr.f32.mxu0 0.0
        %2101 = vmatmul.mubr.f32.gmra.mrb[0].mxu0 %v2029
        %v2102 = vpop.f32.mrb[0].mxu0
        %v2103 = vadd.f32 0.0, %v2102
        %v2104 = vpop.f32.mrb[0].mxu0
        %2105 = vdwg.mxu0
        %v2106 = vadd.f32 %v2023, %v2098
        %v2107 = vadd.f32 %v2024, %v2103
        %2108 = vst [vmem:[#allocation2] sm:$0xff] %v2106
        %2109 = vst [vmem:[#allocation2 + $0x8] sm:$0xff] %v2107
        %v2110 = vld [vmem:[#allocation2] sm:$0xff]
        %v2111 = vld [vmem:[#allocation2 + $0x8] sm:$0xff]
        %v2112 = vld [vmem:[%s5] sm:$0x1]
        %v2114 = vlaneseq
        %v2115 = vshrl.u32 %v2114, 7
        %v2116 = vsub.s32 0, %v2115
        %v2117 = vrot.slane %v2112, %v2116
        %v2119 = vadd.f32 %v2110, %v2117
        %v2120 = vadd.f32 %v2111, %v2117
        %2121 = vst [vmem:[%s245] sm:$0xff] %v2119
        %2122 = vst [vmem:[%s245 + $0x8] sm:$0xff] %v2120
        %s2123 = sand.u32 %s159, 1
        %s2124 = scalar_lea.sflag [#allocation4], %s2123
        %s2125 = sand.u32 %s159, 1
        %s2126 = smul.addr %s2125, 16
        %s2127 = scalar_lea.vmem [#allocation3], %s2126
        // Predicated region
        $region45: #{tpu_custom_call.1} parent=43 // pred_check
          %p2128 = pneg %p169
        $region46: #{tpu_custom_call.1} parent=43 // pred_check_branch
          %2130 = sbr.rel (%p2128) target = $region48
        $region47: #{tpu_custom_call.1} parent=43 // pred_region
          %s2131 = smul.u32 2, %s20
          %s2133 = ssub.s32 256, 256
          %2134 = vsyncadd %s2124, %s2133
          %s2135 = smul.addr %s2131, 128
          %s2136 = scalar_lea.hbm %s6, %s2135
          %s2137 = sshll.u32 %s2127, 4
          %s2138 = int_to_ptr.vmem [resolvable:$true] %s2137
          %2143 = dma.vmem_to_hbm [thread:$0]  %s2138, 256, %s2136, %s2124, 128, 128, 8
        $region48: #{tpu_custom_call.1} parent=43 // pred_fallthru
          _
      $region44: #{tpu_custom_call.1} parent=5 // pred_fallthru
        _
      %p2144 = scmp.le.s32.totalorder 2, %s15
      // Predicated region
      $region49: #{tpu_custom_call.1} parent=5 // pred_check
        %p2145 = pneg %p2144
      $region50: #{tpu_custom_call.1} parent=5 // pred_check_branch
        %2147 = sbr.rel (%p2145) target = $region52
      $region51: #{tpu_custom_call.1} parent=5 // pred_region
        %s2148 = ssub.s32 %s15, 2
        // Predicated region
        $region53: #{tpu_custom_call.1} parent=51 // pred_check
          %p2149 = pneg %p175
        $region54: #{tpu_custom_call.1} parent=51 // pred_check_branch
          %2151 = sbr.rel (%p2149) target = $region56
        $region55: #{tpu_custom_call.1} parent=51 // pred_region
          %s2152 = sand.u32 %s160, 1
          %s2153 = scalar_lea.sflag [#allocation4], %s2152
          %s2154 = sand.u32 %s160, 1
          %s2155 = smul.addr %s2154, 16
          %s2156 = scalar_lea.vmem [#allocation3], %s2155
          %2157 = dma.done %s2153, 256
        $region56: #{tpu_custom_call.1} parent=51 // pred_fallthru
          _
      $region52: #{tpu_custom_call.1} parent=5 // pred_fallthru
        _
    $region6: #{tpu_custom_call.1} parent=1 // loop_footer
      %s19 = sadd.s32 1, %s15
    $region7: #{tpu_custom_call.1} parent=1 // loop_footer_branch
      %14 = sbr.rel target = $region3
    $region8: #{tpu_custom_call.1} parent=1 // loop_exit
      _
    %2158 = vsyncpa [#allocation4], 1
    %s2159 = scalar_lea.sflag [#allocation4], 1
    %2160 = vsyncpa %s2159, 1

</llo_original>
